<compile_context>
chip_gen: v7x
topology: tpu7x:2x2x1
jax: 0.10.0
libtpu: 0.0.40
codegen_flags: <defaults>
</compile_context>

<pallas_src>
import jax
import jax.numpy as jnp
from jax.experimental import pallas as pl
from jax.experimental.pallas import tpu as pltpu


def ca_layer_kernel(x_ref, m1_ref, b1_ref, w2t_ref, b2_ref, e_ref, o_ref):
    x = x_ref[...]                                   # (bt, C*T), native dtype (kept for rescale)
    xb = x.astype(jnp.bfloat16)                      # bf16 MXU inputs, f32 accumulation

    # extract (time reduction) fused with the first 1x1 conv: z1 = relu(x @ M1 + b1')
    z1 = jnp.dot(xb, m1_ref[...], preferred_element_type=jnp.float32) + b1_ref[...]
    z1 = jnp.maximum(z1, 0.0)                        # (bt, Cr)

    # second 1x1 conv + sigmoid (tiny; MXU + VPU + EUP)
    z2 = jnp.dot(z1, w2t_ref[...], preferred_element_type=jnp.float32) + b2_ref[...]
    z2 = jax.nn.sigmoid(z2)                          # (bt, C)

    # broadcast the per-channel gate to (bt, C*T) via a constant 0/1 bf16 matmul
    scale = jnp.dot(z2.astype(jnp.bfloat16), e_ref[...],
                    preferred_element_type=jnp.float32)   # (bt, C*T)

    # fused rescale: single store, no materialization of `scale` to scratch
    o_ref[...] = (x * scale.astype(x.dtype)).astype(o_ref.dtype)


def weight_norm_effective(v, g):
    # PyTorch weight_norm: w = g * v / ||v||, norm over all dims except dim 0.
    norm = jnp.sqrt(jnp.sum(v * v, axis=tuple(range(1, v.ndim)), keepdims=True))
    return g * v / norm


def _padded_vmem_bytes(shape, dtype):
    """VMEM footprint of a 2-D block after (sublane, lane) tile padding."""
    itemsize = jnp.dtype(dtype).itemsize
    sublane = 8 * max(1, 4 // itemsize)          # 8 for f32, 16 for bf16
    rows = shape[-2] if len(shape) > 1 else 1
    cols = shape[-1]
    rows_p = -(-rows // sublane) * sublane
    cols_p = -(-cols // 128) * 128
    return rows_p * cols_p * itemsize


def _vmem_budget_bytes():
    """Per-generation VMEM budget for this kernel's pipeline.

    v5e/v6e have 128 MiB physical VMEM, v7x only 64 MiB.  Target ~60% of
    physical (leaves compiler scratch headroom); fall back to a v7x-safe
    default if the hardware query is unavailable.
    """
    cap = 64 * 1024 * 1024
    try:
        info = pltpu.get_tpu_info()
        cap = int(getattr(info, "vmem_capacity_bytes", cap))
    except Exception:
        pass
    return int(min(cap * 0.6, 96 * 1024 * 1024))


def _round_down_8(n):
    return max(8, (int(n) // 8) * 8)


def ca_layer(x, params):
    B, C, T = x.shape
    we, be, w1, b1, w2, b2 = params
    Cr = w1.shape[0]
    CT = C * T
    f32, bf16 = jnp.float32, jnp.bfloat16

    # ---- constant operands (built once, outside the kernel) ----------------
    # Segment-sum matrix M[c*T + t, c] = we[t] (time reduction as a matmul),
    # folded with the first dense:  M1 = M @ W1^T   (exact; ReLU comes after).
    m = jnp.kron(jnp.eye(C, dtype=f32), we.astype(f32).reshape(T, 1))        # (C*T, C)
    m1 = (m @ w1.astype(f32).T).astype(bf16)                                  # (C*T, Cr)
    # Segment-expand matrix E[c, c*T + t] = 1  (0/1 -> exact in bf16).
    e = jnp.kron(jnp.eye(C, dtype=bf16), jnp.ones((1, T), dtype=bf16))        # (C, C*T)
    # Fold the scalar extract bias into the first dense bias:
    #   relu(W1 @ (y + be) + b1) == relu(W1 @ y + (b1 + be * W1.sum(-1)))
    b1_eff = (b1.astype(f32)
              + be.astype(f32)[0] * jnp.sum(w1.astype(f32), axis=1)).reshape(1, Cr)
    b2_r = b2.astype(f32).reshape(1, C)
    w2t = w2.astype(f32).T                                                    # (Cr, C)

    # TODO(synk): M1/E scale as C^2*T; for C >= 64 or long T switch to a
    # channel-group grid axis (block-diagonal (Cg*T, Cg) / (Cg, Cg*T) tiles)
    # or a 3-D (bt, C, T) layout with lane reduce / lane broadcast.

    # ---- per-generation batch tile ------------------------------------------
    itemsize = jnp.dtype(x.dtype).itemsize
    budget = _vmem_budget_bytes()
    # Resident constants: constant index_maps -> fetched once; charge two
    # pipeline buffers each to stay conservative.
    const_bytes = 2 * (_padded_vmem_bytes((CT, Cr), bf16)
                       + _padded_vmem_bytes((C, CT), bf16)
                       + _padded_vmem_bytes((Cr, C), f32)
                       + _padded_vmem_bytes((1, Cr), f32)
                       + _padded_vmem_bytes((1, C), f32))
    # Double-buffered x tile in + out tile: 4 * bt * CT * itemsize.
    bt_vmem = _round_down_8((budget - const_bytes) // (4 * CT * itemsize))

    # Scheduling cap: keep >= 2 (ideally 4, even) grid steps when B allows, so
    # v7x's two TensorCores both get blocks and DMA/compute overlap is real.
    if B >= 32:
        bt_sched = _round_down_8(B // 4)
    elif B >= 16:
        bt_sched = _round_down_8(B // 2)
    else:
        bt_sched = 8
    bt = int(min(256, bt_vmem, bt_sched))

    # Pad the batch up to a multiple of bt (zero rows -> zero outputs, sliced
    # off afterwards).  Never fall back to a single giant full-batch block.
    Bp = -(-B // bt) * bt
    x2 = x.reshape(B, CT)                      # lane-dense view (free row-major reshape)
    if Bp != B:
        x2 = jnp.pad(x2, ((0, Bp - B), (0, 0)))
    grid = (Bp // bt,)

    const = lambda i: (0, 0)
    out2 = pl.pallas_call(
        ca_layer_kernel,
        out_shape=jax.ShapeDtypeStruct((Bp, CT), x.dtype),
        grid=grid,
        in_specs=[
            pl.BlockSpec((bt, CT), lambda i: (i, 0)),   # x tile (pipelined over batch)
            pl.BlockSpec((CT, Cr), const),              # M1 = segment-sum @ W1^T (bf16)
            pl.BlockSpec((1, Cr), const),               # b1 (+ folded extract bias)
            pl.BlockSpec((Cr, C), const),               # W2^T
            pl.BlockSpec((1, C), const),                # b2
            pl.BlockSpec((C, CT), const),               # segment-expand matrix (bf16)
        ],
        out_specs=pl.BlockSpec((bt, CT), lambda i: (i, 0)),
        compiler_params=pltpu.CompilerParams(
            dimension_semantics=("parallel",),
            vmem_limit_bytes=budget,
        ),
        cost_estimate=pl.CostEstimate(
            flops=int(2 * Bp * CT * Cr        # fused extract + first dense
                      + 2 * Bp * Cr * C       # second dense
                      + 2 * Bp * C * CT       # gate expand matmul
                      + Bp * CT),             # rescale
            transcendentals=int(Bp * C),      # sigmoid
            bytes_accessed=int(2 * Bp * CT * itemsize
                               + (CT * Cr + C * CT) * 2
                               + (Cr * C + Cr + C) * 4),
        ),
    )(x2, m1, b1_eff, w2t, b2_r, e)

    return out2[:B].reshape(B, C, T)


def ca_layer_ref(x, params):
    we, be, w1, b1, w2, b2 = params
    y1 = jnp.einsum("bct,t->bc", x, we) + be[0]
    z1 = jnp.maximum(y1 @ w1.T + b1, 0.0)
    z2 = jax.nn.sigmoid(z1 @ w2.T + b2)
    return x * z2[:, :, None]


if __name__ == "__main__":
    # Shapes consistent with the module defaults: time=96, reduction=8.
    # batch=64 -> bt=16 and a 4-step, even grid (pipelined + v7x megacore split).
    B, C, T, reduction = 64, 16, 96, 8
    Cr = C // reduction

    key = jax.random.PRNGKey(0)
    ks = jax.random.split(key, 9)

    x = jax.random.normal(ks[0], (B, C, T), dtype=jnp.float32)

    # extract: Conv1d(time, 1, 1) -> weight (1, T, 1), bias (1,)
    we = jax.random.normal(ks[1], (T,), dtype=jnp.float32) * 0.1
    be = jax.random.normal(ks[2], (1,), dtype=jnp.float32) * 0.1

    # conv_du[0]: weight_norm(Conv1d(C, Cr, 1)) -> v (Cr, C, 1), g (Cr, 1, 1), bias (Cr,)
    v1 = jax.random.normal(ks[3], (Cr, C, 1), dtype=jnp.float32) * 0.2
    g1 = jnp.abs(jax.random.normal(ks[4], (Cr, 1, 1), dtype=jnp.float32)) + 0.5
    b1 = jax.random.normal(ks[5], (Cr,), dtype=jnp.float32) * 0.1
    w1 = weight_norm_effective(v1, g1)[:, :, 0]     # (Cr, C)

    # conv_du[2]: weight_norm(Conv1d(Cr, C, 1)) -> v (C, Cr, 1), g (C, 1, 1), bias (C,)
    v2 = jax.random.normal(ks[6], (C, Cr, 1), dtype=jnp.float32) * 0.2
    g2 = jnp.abs(jax.random.normal(ks[7], (C, 1, 1), dtype=jnp.float32)) + 0.5
    b2 = jax.random.normal(ks[8], (C,), dtype=jnp.float32) * 0.1
    w2 = weight_norm_effective(v2, g2)[:, :, 0]     # (C, Cr)

    params = (we, be, w1, b1, w2, b2)

    out = ca_layer(x, params)
    out = jax.block_until_ready(out)

    ref = ca_layer_ref(x, params)
    assert out.shape == x.shape
    # bf16 MXU inputs -> tolerance loosened from the f32-only 1e-4.
    assert jnp.allclose(out, ref, atol=5e-2, rtol=5e-2), "mismatch vs reference"

    print("KERNEL_OK")
</pallas_src>

<mosaic_0001>
module attributes {stable_mosaic.version = 11 : i64} {
  func.func @ca_layer_kernel(%arg0: i32, %arg1: memref<16x1536xf32, #tpu.memory_space<vmem>>, %arg2: memref<1536x2xbf16, #tpu.memory_space<vmem>>, %arg3: memref<1x2xf32, #tpu.memory_space<vmem>>, %arg4: memref<2x16xf32, #tpu.memory_space<vmem>>, %arg5: memref<1x16xf32, #tpu.memory_space<vmem>>, %arg6: memref<16x1536xbf16, #tpu.memory_space<vmem>>, %arg7: memref<16x1536xf32, #tpu.memory_space<vmem>>) attributes {dimension_semantics = [#tpu.dimension_semantics<parallel>], iteration_bounds = array<i64: 4>, scalar_prefetch = 0 : i64, scratch_operands = 0 : i64, tpu.core_type = #tpu.core_type<tc>, window_params = [{transform_indices = @transform_0, window_bounds = array<i64: 16, 1536>}, {pipeline_mode = #tpu.pipeline_mode<synchronous>, transform_indices = @transform_1, window_bounds = array<i64: 1536, 2>}, {pipeline_mode = #tpu.pipeline_mode<synchronous>, transform_indices = @transform_2, window_bounds = array<i64: 1, 2>}, {pipeline_mode = #tpu.pipeline_mode<synchronous>, transform_indices = @transform_3, window_bounds = array<i64: 2, 16>}, {pipeline_mode = #tpu.pipeline_mode<synchronous>, transform_indices = @transform_4, window_bounds = array<i64: 1, 16>}, {pipeline_mode = #tpu.pipeline_mode<synchronous>, transform_indices = @transform_5, window_bounds = array<i64: 16, 1536>}, {transform_indices = @transform_6, window_bounds = array<i64: 16, 1536>}]} {
    %c0 = arith.constant 0 : index
    %c0_0 = arith.constant 0 : index
    %0 = vector.load %arg1[%c0, %c0_0] : memref<16x1536xf32, #tpu.memory_space<vmem>>, vector<16x1536xf32>
    %1 = arith.truncf %0 : vector<16x1536xf32> to vector<16x1536xbf16>
    %c0_1 = arith.constant 0 : index
    %c0_2 = arith.constant 0 : index
    %2 = vector.load %arg2[%c0_1, %c0_2] : memref<1536x2xbf16, #tpu.memory_space<vmem>>, vector<1536x2xbf16>
    %cst = arith.constant dense<0.000000e+00> : vector<16x2xf32>
    %3 = tpu.matmul %1, %2, %cst {dimension_numbers = #tpu.dot_dimension_numbers<[1], [0], [0], [1], [0, 0, 1, 1], [], []>} : vector<16x1536xbf16>, vector<1536x2xbf16>, vector<16x2xf32> -> vector<16x2xf32>
    %c0_3 = arith.constant 0 : index
    %c0_4 = arith.constant 0 : index
    %4 = vector.load %arg3[%c0_3, %c0_4] : memref<1x2xf32, #tpu.memory_space<vmem>>, vector<1x2xf32>
    %5 = vector.broadcast %4 : vector<1x2xf32> to vector<16x2xf32>
    %6 = arith.addf %3, %5 : vector<16x2xf32>
    %cst_5 = arith.constant 0.000000e+00 : f32
    %7 = vector.broadcast %cst_5 : f32 to vector<16x2xf32>
    %8 = arith.maximumf %6, %7 : vector<16x2xf32>
    %c0_6 = arith.constant 0 : index
    %c0_7 = arith.constant 0 : index
    %9 = vector.load %arg4[%c0_6, %c0_7] : memref<2x16xf32, #tpu.memory_space<vmem>>, vector<2x16xf32>
    %cst_8 = arith.constant dense<0.000000e+00> : vector<16x16xf32>
    %10 = tpu.matmul %8, %9, %cst_8 {dimension_numbers = #tpu.dot_dimension_numbers<[1], [0], [0], [1], [0, 0, 1, 1], [], []>} : vector<16x2xf32>, vector<2x16xf32>, vector<16x16xf32> -> vector<16x16xf32>
    %c0_9 = arith.constant 0 : index
    %c0_10 = arith.constant 0 : index
    %11 = vector.load %arg5[%c0_9, %c0_10] : memref<1x16xf32, #tpu.memory_space<vmem>>, vector<1x16xf32>
    %12 = vector.broadcast %11 : vector<1x16xf32> to vector<16x16xf32>
    %13 = arith.addf %10, %12 : vector<16x16xf32>
    %14 = arith.negf %13 : vector<16x16xf32>
    %15 = math.exp %14 : vector<16x16xf32>
    %cst_11 = arith.constant 1.000000e+00 : f32
    %16 = vector.broadcast %cst_11 : f32 to vector<16x16xf32>
    %17 = arith.addf %16, %15 : vector<16x16xf32>
    %18 = arith.divf %16, %17 : vector<16x16xf32>
    %19 = arith.truncf %18 : vector<16x16xf32> to vector<16x16xbf16>
    %c0_12 = arith.constant 0 : index
    %c0_13 = arith.constant 0 : index
    %20 = vector.load %arg6[%c0_12, %c0_13] : memref<16x1536xbf16, #tpu.memory_space<vmem>>, vector<16x1536xbf16>
    %cst_14 = arith.constant dense<0.000000e+00> : vector<16x1536xf32>
    %21 = tpu.matmul %19, %20, %cst_14 {dimension_numbers = #tpu.dot_dimension_numbers<[1], [0], [0], [1], [0, 0, 1, 1], [], []>} : vector<16x16xbf16>, vector<16x1536xbf16>, vector<16x1536xf32> -> vector<16x1536xf32>
    %22 = arith.mulf %0, %21 : vector<16x1536xf32>
    %c0_15 = arith.constant 0 : index
    %c0_16 = arith.constant 0 : index
    %23 = vector.load %arg7[%c0_15, %c0_16] : memref<16x1536xf32, #tpu.memory_space<vmem>>, vector<16x1536xf32>
    tpu.vector_store %arg7[%c0_15, %c0_16], %22 {strides = array<i32>} : memref<16x1536xf32, #tpu.memory_space<vmem>>, vector<16x1536xf32>,
    return
  }
  func.func @transform_0(%arg0: i32) -> (i32, i32) {
    %c0_i32 = arith.constant 0 : i32
    %c0_i32_0 = arith.constant 0 : i32
    return %arg0, %c0_i32 : i32, i32
  }
  func.func @transform_1(%arg0: i32) -> (i32, i32) {
    %c0_i32 = arith.constant 0 : i32
    %c0_i32_0 = arith.constant 0 : i32
    %c0_i32_1 = arith.constant 0 : i32
    return %c0_i32, %c0_i32_0 : i32, i32
  }
  func.func @transform_2(%arg0: i32) -> (i32, i32) {
    %c0_i32 = arith.constant 0 : i32
    %c0_i32_0 = arith.constant 0 : i32
    %c0_i32_1 = arith.constant 0 : i32
    return %c0_i32, %c0_i32_0 : i32, i32
  }
  func.func @transform_3(%arg0: i32) -> (i32, i32) {
    %c0_i32 = arith.constant 0 : i32
    %c0_i32_0 = arith.constant 0 : i32
    %c0_i32_1 = arith.constant 0 : i32
    return %c0_i32, %c0_i32_0 : i32, i32
  }
  func.func @transform_4(%arg0: i32) -> (i32, i32) {
    %c0_i32 = arith.constant 0 : i32
    %c0_i32_0 = arith.constant 0 : i32
    %c0_i32_1 = arith.constant 0 : i32
    return %c0_i32, %c0_i32_0 : i32, i32
  }
  func.func @transform_5(%arg0: i32) -> (i32, i32) {
    %c0_i32 = arith.constant 0 : i32
    %c0_i32_0 = arith.constant 0 : i32
    %c0_i32_1 = arith.constant 0 : i32
    return %c0_i32, %c0_i32_0 : i32, i32
  }
  func.func @transform_6(%arg0: i32) -> (i32, i32) {
    %c0_i32 = arith.constant 0 : i32
    %c0_i32_0 = arith.constant 0 : i32
    return %arg0, %c0_i32 : i32, i32
  }
}

</mosaic_0001>

<llo_original>
// kernel: tpu_custom_call.1
$region0: #{tpu_custom_call.1}
  #allocation0 [shape = 'u32[]', space=smem, size = 0x4, offset = 0x4, fixed_abs, tag = 'smem constant byte address 0x4 - core index']
  #allocation1 [shape = 'u32[144,128]{1,0:T(1,128)}', space=vmem, size = 0x12000, scoped, tag = 'internal scratch']
  %s0 = inlined_call_operand.vmem [shape: f32[64,1536], index: 0, kind: input, shape index: {}]
  %s1 = inlined_call_operand.vmem [shape: bf16[1536,2], index: 1, kind: input, shape index: {}]
  %s2 = inlined_call_operand.vmem [shape: f32[1,2], index: 2, kind: input, shape index: {}]
  %s3 = inlined_call_operand.vmem [shape: f32[2,16], index: 3, kind: input, shape index: {}]
  %s4 = inlined_call_operand.vmem [shape: f32[1,16], index: 4, kind: input, shape index: {}]
  %s5 = inlined_call_operand.hbm [shape: bf16[16,1536], index: 5, kind: input, shape index: {}]
  %s6 = inlined_call_operand.hbm [shape: f32[64,1536], index: 6, kind: output, shape index: {}]
  %s7 = sld [smem:[#allocation0]]
  $region61: #{tpu_custom_call.1} parent=0
    _
  %s9 = ssub.s32 1, %s7
  %s10 = scalar_select 0, %s9, %s7
  $region1: #{tpu_custom_call.1} parent=0
    #allocation2 [shape = 'u8[49152]{0}', space=vmem, size = 0xc000, scoped, tag = 'input window, operand 5, single buffered']
    #allocation3 [shape = 's32[2]{0}', space=sflag, size = 0x8, scoped, tag = 'scoped memory for tpu_custom_call.1']
    #allocation4 [shape = 's32[2]{0}', space=sflag, size = 0x8, scoped, tag = 'scoped memory for tpu_custom_call.1']
    #allocation5 [shape = 'u8[196608]{0}', space=vmem, size = 0x30000, scoped, tag = 'output window, operand 0']
    %11 = vsyncpa [#allocation3], 0
    %12 = vsyncpa [#allocation4], 0
    %s13 = scalar_lea.sflag [#allocation4], 1
    %14 = vsyncpa %s13, 0
    loop: start=0, step=1, limit=6
    $region2: #{tpu_custom_call.1} parent=1 // loop_pre_header
      _
    $region3: #{tpu_custom_call.1} parent=1 // loop_header
      %s16 = sphi 0, %s20
      %p17 = scmp.ge.s32.totalorder %s16, 6
      %s26 = sphi 0, %s28
      %s29 = sphi 0, %s26
      %s30 = sphi 0, %s29
      %s46 = sphi 0, %s30
      %s50 = sphi 0, %s50
      %s52 = sphi 0, %s50
      %s53 = sphi 0, %s52
      %s67 = sphi 0, %s53
      %s71 = sphi 0, %s71
      %s73 = sphi 0, %s71
      %s74 = sphi 0, %s73
      %s88 = sphi 0, %s74
      %s92 = sphi 0, %s92
      %s94 = sphi 0, %s92
      %s95 = sphi 0, %s94
      %s109 = sphi 0, %s95
      %s113 = sphi 0, %s113
      %s115 = sphi 0, %s113
      %s116 = sphi 0, %s115
      %s130 = sphi 0, %s116
      %s134 = sphi 0, %s134
      %s136 = sphi 0, %s134
      %s137 = sphi 0, %s136
      %s151 = sphi 0, %s137
      %s157 = sphi 0, %s159
      %s160 = sphi 0, %s157
      %s161 = sphi 0, %s160
      %s177 = sphi 0, %s161
    $region4: #{tpu_custom_call.1} parent=1 // loop_header_branch
      %19 = sbr.rel (%p17) target = $region8
    $region5: #{tpu_custom_call.1} parent=1 // loop_body
      %s21 = ssub.s32 %s16, 1
      %s22 = ssub.s32 %s16, 2
      %s23 = sadd.s32 %s16, 1
      %s24 = ssub.s32 %s16, %s23
      %p25 = scmp.eq.s32.totalorder %s24, 0
      %s27 = sadd.s32 %s26, 1
      %s28 = scalar_select %p25, %s26, %s27
      %p31 = pneg %p25
      %p32 = scmp.eq.s32.totalorder %s16, 3
      %p33 = por %p31, %p32
      %p34 = scmp.ne.s32.totalorder %s26, %s29
      %p35 = scmp.eq.s32.totalorder %s16, 0
      %p36 = por %p34, %p35
      %p37 = scmp.ne.s32.totalorder %s26, %s29
      %p38 = scmp.eq.s32.totalorder %s21, 3
      %p39 = por %p37, %p38
      %p40 = scmp.ne.s32.totalorder %s29, %s30
      %p41 = scmp.eq.s32.totalorder %s21, 0
      %p42 = por %p40, %p41
      %p43 = scmp.ne.s32.totalorder %s29, %s30
      %p44 = scmp.eq.s32.totalorder %s22, 3
      %p45 = por %p43, %p44
      %p47 = scmp.ne.s32.totalorder %s30, %s46
      %p48 = scmp.eq.s32.totalorder %s22, 0
      %p49 = por %p47, %p48
      %s51 = sadd.s32 %s50, 1
      %p54 = scmp.eq.s32.totalorder %s16, 3
      %p55 = scmp.ne.s32.totalorder %s50, %s52
      %p56 = scmp.eq.s32.totalorder %s16, 0
      %p57 = por %p55, %p56
      %p58 = scmp.ne.s32.totalorder %s50, %s52
      %p59 = scmp.eq.s32.totalorder %s21, 3
      %p60 = por %p58, %p59
      %p61 = scmp.ne.s32.totalorder %s52, %s53
      %p62 = scmp.eq.s32.totalorder %s21, 0
      %p63 = por %p61, %p62
      %p64 = scmp.ne.s32.totalorder %s52, %s53
      %p65 = scmp.eq.s32.totalorder %s22, 3
      %p66 = por %p64, %p65
      %p68 = scmp.ne.s32.totalorder %s53, %s67
      %p69 = scmp.eq.s32.totalorder %s22, 0
      %p70 = por %p68, %p69
      %s72 = sadd.s32 %s71, 1
      %p75 = scmp.eq.s32.totalorder %s16, 3
      %p76 = scmp.ne.s32.totalorder %s71, %s73
      %p77 = scmp.eq.s32.totalorder %s16, 0
      %p78 = por %p76, %p77
      %p79 = scmp.ne.s32.totalorder %s71, %s73
      %p80 = scmp.eq.s32.totalorder %s21, 3
      %p81 = por %p79, %p80
      %p82 = scmp.ne.s32.totalorder %s73, %s74
      %p83 = scmp.eq.s32.totalorder %s21, 0
      %p84 = por %p82, %p83
      %p85 = scmp.ne.s32.totalorder %s73, %s74
      %p86 = scmp.eq.s32.totalorder %s22, 3
      %p87 = por %p85, %p86
      %p89 = scmp.ne.s32.totalorder %s74, %s88
      %p90 = scmp.eq.s32.totalorder %s22, 0
      %p91 = por %p89, %p90
      %s93 = sadd.s32 %s92, 1
      %p96 = scmp.eq.s32.totalorder %s16, 3
      %p97 = scmp.ne.s32.totalorder %s92, %s94
      %p98 = scmp.eq.s32.totalorder %s16, 0
      %p99 = por %p97, %p98
      %p100 = scmp.ne.s32.totalorder %s92, %s94
      %p101 = scmp.eq.s32.totalorder %s21, 3
      %p102 = por %p100, %p101
      %p103 = scmp.ne.s32.totalorder %s94, %s95
      %p104 = scmp.eq.s32.totalorder %s21, 0
      %p105 = por %p103, %p104
      %p106 = scmp.ne.s32.totalorder %s94, %s95
      %p107 = scmp.eq.s32.totalorder %s22, 3
      %p108 = por %p106, %p107
      %p110 = scmp.ne.s32.totalorder %s95, %s109
      %p111 = scmp.eq.s32.totalorder %s22, 0
      %p112 = por %p110, %p111
      %s114 = sadd.s32 %s113, 1
      %p117 = scmp.eq.s32.totalorder %s16, 3
      %p118 = scmp.ne.s32.totalorder %s113, %s115
      %p119 = scmp.eq.s32.totalorder %s16, 0
      %p120 = por %p118, %p119
      %p121 = scmp.ne.s32.totalorder %s113, %s115
      %p122 = scmp.eq.s32.totalorder %s21, 3
      %p123 = por %p121, %p122
      %p124 = scmp.ne.s32.totalorder %s115, %s116
      %p125 = scmp.eq.s32.totalorder %s21, 0
      %p126 = por %p124, %p125
      %p127 = scmp.ne.s32.totalorder %s115, %s116
      %p128 = scmp.eq.s32.totalorder %s22, 3
      %p129 = por %p127, %p128
      %p131 = scmp.ne.s32.totalorder %s116, %s130
      %p132 = scmp.eq.s32.totalorder %s22, 0
      %p133 = por %p131, %p132
      %s135 = sadd.s32 %s134, 1
      %p138 = scmp.eq.s32.totalorder %s16, 3
      %p139 = scmp.ne.s32.totalorder %s134, %s136
      %p140 = scmp.eq.s32.totalorder %s16, 0
      %p141 = por %p139, %p140
      %p142 = scmp.ne.s32.totalorder %s134, %s136
      %p143 = scmp.eq.s32.totalorder %s21, 3
      %p144 = por %p142, %p143
      %p145 = scmp.ne.s32.totalorder %s136, %s137
      %p146 = scmp.eq.s32.totalorder %s21, 0
      %p147 = por %p145, %p146
      %p148 = scmp.ne.s32.totalorder %s136, %s137
      %p149 = scmp.eq.s32.totalorder %s22, 3
      %p150 = por %p148, %p149
      %p152 = scmp.ne.s32.totalorder %s137, %s151
      %p153 = scmp.eq.s32.totalorder %s22, 0
      %p154 = por %p152, %p153
      %s155 = ssub.s32 %s16, %s23
      %p156 = scmp.eq.s32.totalorder %s155, 0
      %s158 = sadd.s32 %s157, 1
      %s159 = scalar_select %p156, %s157, %s158
      %p162 = pneg %p156
      %p163 = scmp.eq.s32.totalorder %s16, 3
      %p164 = por %p162, %p163
      %p165 = scmp.ne.s32.totalorder %s157, %s160
      %p166 = scmp.eq.s32.totalorder %s16, 0
      %p167 = por %p165, %p166
      %p168 = scmp.ne.s32.totalorder %s157, %s160
      %p169 = scmp.eq.s32.totalorder %s21, 3
      %p170 = por %p168, %p169
      %p171 = scmp.ne.s32.totalorder %s160, %s161
      %p172 = scmp.eq.s32.totalorder %s21, 0
      %p173 = por %p171, %p172
      %p174 = scmp.ne.s32.totalorder %s160, %s161
      %p175 = scmp.eq.s32.totalorder %s22, 3
      %p176 = por %p174, %p175
      %p178 = scmp.ne.s32.totalorder %s161, %s177
      %p179 = scmp.eq.s32.totalorder %s22, 0
      %p180 = por %p178, %p179
      %p181 = scmp.le.s32.totalorder 1, %s16
      %p182 = scmp.lt.s32.totalorder %s16, 5
      %p183 = pnand %p181, %p182
      %p184 = pneg %p183
      // Predicated region
      $region9: #{tpu_custom_call.1} parent=5 // pred_check
        _
      $region10: #{tpu_custom_call.1} parent=5 // pred_check_branch
        %186 = sbr.rel (%p183) target = $region12
      $region11: #{tpu_custom_call.1} parent=5 // pred_region
        %s187 = ssub.s32 %s16, 1
        // Predicated region
        $region13: #{tpu_custom_call.1} parent=11 // pred_check
          %p188 = pneg %p63
        $region14: #{tpu_custom_call.1} parent=11 // pred_check_branch
          %190 = sbr.rel (%p188) target = $region16
        $region15: #{tpu_custom_call.1} parent=11 // pred_region
          _
        $region16: #{tpu_custom_call.1} parent=11 // pred_fallthru
          _
        // Predicated region
        $region17: #{tpu_custom_call.1} parent=11 // pred_check
          %p191 = pneg %p84
        $region18: #{tpu_custom_call.1} parent=11 // pred_check_branch
          %193 = sbr.rel (%p191) target = $region20
        $region19: #{tpu_custom_call.1} parent=11 // pred_region
          _
        $region20: #{tpu_custom_call.1} parent=11 // pred_fallthru
          _
        // Predicated region
        $region21: #{tpu_custom_call.1} parent=11 // pred_check
          %p194 = pneg %p105
        $region22: #{tpu_custom_call.1} parent=11 // pred_check_branch
          %196 = sbr.rel (%p194) target = $region24
        $region23: #{tpu_custom_call.1} parent=11 // pred_region
          _
        $region24: #{tpu_custom_call.1} parent=11 // pred_fallthru
          _
        // Predicated region
        $region25: #{tpu_custom_call.1} parent=11 // pred_check
          %p197 = pneg %p126
        $region26: #{tpu_custom_call.1} parent=11 // pred_check_branch
          %199 = sbr.rel (%p197) target = $region28
        $region27: #{tpu_custom_call.1} parent=11 // pred_region
          _
        $region28: #{tpu_custom_call.1} parent=11 // pred_fallthru
          _
        // Predicated region
        $region29: #{tpu_custom_call.1} parent=11 // pred_check
          %p200 = pneg %p147
        $region30: #{tpu_custom_call.1} parent=11 // pred_check_branch
          %202 = sbr.rel (%p200) target = $region32
        $region31: #{tpu_custom_call.1} parent=11 // pred_region
          %s204 = ssub.s32 1536, 1536
          %205 = vsyncadd [#allocation3], %s204
          %s206 = sshll.u32 [#allocation2], 4
          %s207 = int_to_ptr.vmem [resolvable:$true] %s206
          %212 = dma.hbm_to_vmem [thread:$0]  %s5, 1536, %s207, [#allocation3], 768, 768, 48
        $region32: #{tpu_custom_call.1} parent=11 // pred_fallthru
          _
      $region12: #{tpu_custom_call.1} parent=5 // pred_fallthru
        _
      %p213 = scmp.lt.s32.totalorder %s16, 4
      // Predicated region
      $region33: #{tpu_custom_call.1} parent=5 // pred_check
        %p214 = pneg %p213
      $region34: #{tpu_custom_call.1} parent=5 // pred_check_branch
        %216 = sbr.rel (%p214) target = $region36
      $region35: #{tpu_custom_call.1} parent=5 // pred_region
        // Predicated region
        $region37: #{tpu_custom_call.1} parent=35 // pred_check
          %p217 = pneg %p36
        $region38: #{tpu_custom_call.1} parent=35 // pred_check_branch
          %219 = sbr.rel (%p217) target = $region40
        $region39: #{tpu_custom_call.1} parent=35 // pred_region
          %s220 = smul.u32 2, %s16
          %p221 = scmp.lt.s32.totalorder %s220, 7
          %s222 = scalar_select %p221, %s220, 7
          %s223 = smul.addr %s222, 12
          %s224 = smul.addr %s223, 8
          %s225 = scalar_lea.vmem %s0, %s224
          %s226 = smul.u32 2, %s16
        $region40: #{tpu_custom_call.1} parent=35 // pred_fallthru
          _
      $region36: #{tpu_custom_call.1} parent=5 // pred_fallthru
        _
      %p227 = scmp.le.s32.totalorder 1, %s16
      %p228 = scmp.lt.s32.totalorder %s16, 5
      %p229 = pnand %p227, %p228
      %p230 = pneg %p229
      // Predicated region
      $region41: #{tpu_custom_call.1} parent=5 // pred_check
        _
      $region42: #{tpu_custom_call.1} parent=5 // pred_check_branch
        %232 = sbr.rel (%p229) target = $region44
      $region43: #{tpu_custom_call.1} parent=5 // pred_region
        %s233 = ssub.s32 %s16, 1
        // Predicated region
        $region45: #{tpu_custom_call.1} parent=43 // pred_check
          %p234 = pneg %p147
        $region46: #{tpu_custom_call.1} parent=43 // pred_check_branch
          %236 = sbr.rel (%p234) target = $region48
        $region47: #{tpu_custom_call.1} parent=43 // pred_region
          %237 = dma.done [#allocation3], 1536
        $region48: #{tpu_custom_call.1} parent=43 // pred_fallthru
          _
        %s238 = smul.u32 2, %s21
        %p239 = scmp.lt.s32.totalorder %s238, 7
        %s240 = scalar_select %p239, %s238, 7
        %s241 = smul.addr %s240, 12
        %s242 = smul.addr %s241, 8
        %s243 = scalar_lea.vmem %s0, %s242
        %p244 = pneg %p42
        %p245 = pneg %p39
        %p246 = pneg %p63
        %p247 = pneg %p60
        %p248 = pneg %p84
        %p249 = pneg %p81
        %p250 = pneg %p105
        %p251 = pneg %p102
        %p252 = pneg %p126
        %p253 = pneg %p123
        %p254 = pneg %p147
        %p255 = pneg %p144
        %p256 = pneg %p173
        %p257 = pneg %p170
        %s258 = sand.u32 %s160, 1
        %s259 = scalar_lea.sflag [#allocation4], %s258
        %s260 = sand.u32 %s160, 1
        %s261 = smul.addr %s260, 192
        %s262 = scalar_lea.vmem [#allocation5], %s261
        %s263 = smul.u32 2, %s21
        %p264 = scmp.lt.s32.totalorder %s263, 7
        %s265 = scalar_select %p264, %s263, 7
        %s266 = smul.addr %s265, 12
        %s267 = smul.addr %s266, 8
        %s268 = scalar_lea.vmem %s0, %s267
        %s269 = smul.u32 2, %s21
        %s270 = smul.u32 2, %s21
        %v272 = vld [vmem:[%s268] sm:$0xff]
        %v273 = vld [vmem:[%s268 + $0x8] sm:$0xff]
        %v274 = vld [vmem:[%s268 + $0x10] sm:$0xff]
        %v275 = vld [vmem:[%s268 + $0x18] sm:$0xff]
        %v276 = vld [vmem:[%s268 + $0x20] sm:$0xff]
        %v277 = vld [vmem:[%s268 + $0x28] sm:$0xff]
        %v278 = vld [vmem:[%s268 + $0x30] sm:$0xff]
        %v279 = vld [vmem:[%s268 + $0x38] sm:$0xff]
        %v280 = vld [vmem:[%s268 + $0x40] sm:$0xff]
        %v281 = vld [vmem:[%s268 + $0x48] sm:$0xff]
        %v282 = vld [vmem:[%s268 + $0x50] sm:$0xff]
        %v283 = vld [vmem:[%s268 + $0x58] sm:$0xff]
        %v284 = vld [vmem:[%s268 + $0x60] sm:$0xff]
        %v285 = vld [vmem:[%s268 + $0x68] sm:$0xff]
        %v286 = vld [vmem:[%s268 + $0x70] sm:$0xff]
        %v287 = vld [vmem:[%s268 + $0x78] sm:$0xff]
        %v288 = vld [vmem:[%s268 + $0x80] sm:$0xff]
        %v289 = vld [vmem:[%s268 + $0x88] sm:$0xff]
        %v290 = vld [vmem:[%s268 + $0x90] sm:$0xff]
        %v291 = vld [vmem:[%s268 + $0x98] sm:$0xff]
        %v292 = vld [vmem:[%s268 + $0xa0] sm:$0xff]
        %v293 = vld [vmem:[%s268 + $0xa8] sm:$0xff]
        %v294 = vld [vmem:[%s268 + $0xb0] sm:$0xff]
        %v295 = vld [vmem:[%s268 + $0xb8] sm:$0xff]
        %v296 = vpack.c.bf16 %v284, %v272
        %v297 = vpack.c.bf16 %v285, %v273
        %v298 = vpack.c.bf16 %v286, %v274
        %v299 = vpack.c.bf16 %v287, %v275
        %v300 = vpack.c.bf16 %v288, %v276
        %v301 = vpack.c.bf16 %v289, %v277
        %v302 = vpack.c.bf16 %v290, %v278
        %v303 = vpack.c.bf16 %v291, %v279
        %v304 = vpack.c.bf16 %v292, %v280
        %v305 = vpack.c.bf16 %v293, %v281
        %v306 = vpack.c.bf16 %v294, %v282
        %v307 = vpack.c.bf16 %v295, %v283
        %v308 = vld [vmem:[%s1] sm:$0xf]
        %v309 = vld [vmem:[%s1 + $0x4] sm:$0xf]
        %v310 = vld [vmem:[%s1 + $0x8] sm:$0xf]
        %v311 = vld [vmem:[%s1 + $0xc] sm:$0xf]
        %v312 = vld [vmem:[%s1 + $0x10] sm:$0xf]
        %v313 = vld [vmem:[%s1 + $0x14] sm:$0xf]
        %v314 = vld [vmem:[%s1 + $0x18] sm:$0xf]
        %v315 = vld [vmem:[%s1 + $0x1c] sm:$0xf]
        %v316 = vld [vmem:[%s1 + $0x20] sm:$0xf]
        %v317 = vld [vmem:[%s1 + $0x24] sm:$0xf]
        %v318 = vld [vmem:[%s1 + $0x28] sm:$0xf]
        %v319 = vld [vmem:[%s1 + $0x2c] sm:$0xf]
        %v320 = vld [vmem:[%s1 + $0x30] sm:$0xf]
        %v321 = vld [vmem:[%s1 + $0x34] sm:$0xf]
        %v322 = vld [vmem:[%s1 + $0x38] sm:$0xf]
        %v323 = vld [vmem:[%s1 + $0x3c] sm:$0xf]
        %v324 = vld [vmem:[%s1 + $0x40] sm:$0xf]
        %v325 = vld [vmem:[%s1 + $0x44] sm:$0xf]
        %v326 = vld [vmem:[%s1 + $0x48] sm:$0xf]
        %v327 = vld [vmem:[%s1 + $0x4c] sm:$0xf]
        %v328 = vld [vmem:[%s1 + $0x50] sm:$0xf]
        %v329 = vld [vmem:[%s1 + $0x54] sm:$0xf]
        %v330 = vld [vmem:[%s1 + $0x58] sm:$0xf]
        %v331 = vld [vmem:[%s1 + $0x5c] sm:$0xf]
        %v332 = vld [vmem:[%s1 + $0x60] sm:$0xf]
        %v333 = vld [vmem:[%s1 + $0x64] sm:$0xf]
        %v334 = vld [vmem:[%s1 + $0x68] sm:$0xf]
        %v335 = vld [vmem:[%s1 + $0x6c] sm:$0xf]
        %v336 = vld [vmem:[%s1 + $0x70] sm:$0xf]
        %v337 = vld [vmem:[%s1 + $0x74] sm:$0xf]
        %v338 = vld [vmem:[%s1 + $0x78] sm:$0xf]
        %v339 = vld [vmem:[%s1 + $0x7c] sm:$0xf]
        %v340 = vld [vmem:[%s1 + $0x80] sm:$0xf]
        %v341 = vld [vmem:[%s1 + $0x84] sm:$0xf]
        %v342 = vld [vmem:[%s1 + $0x88] sm:$0xf]
        %v343 = vld [vmem:[%s1 + $0x8c] sm:$0xf]
        %v344 = vld [vmem:[%s1 + $0x90] sm:$0xf]
        %v345 = vld [vmem:[%s1 + $0x94] sm:$0xf]
        %v346 = vld [vmem:[%s1 + $0x98] sm:$0xf]
        %v347 = vld [vmem:[%s1 + $0x9c] sm:$0xf]
        %v348 = vld [vmem:[%s1 + $0xa0] sm:$0xf]
        %v349 = vld [vmem:[%s1 + $0xa4] sm:$0xf]
        %v350 = vld [vmem:[%s1 + $0xa8] sm:$0xf]
        %v351 = vld [vmem:[%s1 + $0xac] sm:$0xf]
        %v352 = vld [vmem:[%s1 + $0xb0] sm:$0xf]
        %v353 = vld [vmem:[%s1 + $0xb4] sm:$0xf]
        %v354 = vld [vmem:[%s1 + $0xb8] sm:$0xf]
        %v355 = vld [vmem:[%s1 + $0xbc] sm:$0xf]
        %v356 = vld [vmem:[%s1 + $0xc0] sm:$0xf]
        %v357 = vld [vmem:[%s1 + $0xc4] sm:$0xf]
        %v358 = vld [vmem:[%s1 + $0xc8] sm:$0xf]
        %v359 = vld [vmem:[%s1 + $0xcc] sm:$0xf]
        %v360 = vld [vmem:[%s1 + $0xd0] sm:$0xf]
        %v361 = vld [vmem:[%s1 + $0xd4] sm:$0xf]
        %v362 = vld [vmem:[%s1 + $0xd8] sm:$0xf]
        %v363 = vld [vmem:[%s1 + $0xdc] sm:$0xf]
        %v364 = vld [vmem:[%s1 + $0xe0] sm:$0xf]
        %v365 = vld [vmem:[%s1 + $0xe4] sm:$0xf]
        %v366 = vld [vmem:[%s1 + $0xe8] sm:$0xf]
        %v367 = vld [vmem:[%s1 + $0xec] sm:$0xf]
        %v368 = vld [vmem:[%s1 + $0xf0] sm:$0xf]
        %v369 = vld [vmem:[%s1 + $0xf4] sm:$0xf]
        %v370 = vld [vmem:[%s1 + $0xf8] sm:$0xf]
        %v371 = vld [vmem:[%s1 + $0xfc] sm:$0xf]
        %v372 = vld [vmem:[%s1 + $0x100] sm:$0xf]
        %v373 = vld [vmem:[%s1 + $0x104] sm:$0xf]
        %v374 = vld [vmem:[%s1 + $0x108] sm:$0xf]
        %v375 = vld [vmem:[%s1 + $0x10c] sm:$0xf]
        %v376 = vld [vmem:[%s1 + $0x110] sm:$0xf]
        %v377 = vld [vmem:[%s1 + $0x114] sm:$0xf]
        %v378 = vld [vmem:[%s1 + $0x118] sm:$0xf]
        %v379 = vld [vmem:[%s1 + $0x11c] sm:$0xf]
        %v380 = vld [vmem:[%s1 + $0x120] sm:$0xf]
        %v381 = vld [vmem:[%s1 + $0x124] sm:$0xf]
        %v382 = vld [vmem:[%s1 + $0x128] sm:$0xf]
        %v383 = vld [vmem:[%s1 + $0x12c] sm:$0xf]
        %v384 = vld [vmem:[%s1 + $0x130] sm:$0xf]
        %v385 = vld [vmem:[%s1 + $0x134] sm:$0xf]
        %v386 = vld [vmem:[%s1 + $0x138] sm:$0xf]
        %v387 = vld [vmem:[%s1 + $0x13c] sm:$0xf]
        %v388 = vld [vmem:[%s1 + $0x140] sm:$0xf]
        %v389 = vld [vmem:[%s1 + $0x144] sm:$0xf]
        %v390 = vld [vmem:[%s1 + $0x148] sm:$0xf]
        %v391 = vld [vmem:[%s1 + $0x14c] sm:$0xf]
        %v392 = vld [vmem:[%s1 + $0x150] sm:$0xf]
        %v393 = vld [vmem:[%s1 + $0x154] sm:$0xf]
        %v394 = vld [vmem:[%s1 + $0x158] sm:$0xf]
        %v395 = vld [vmem:[%s1 + $0x15c] sm:$0xf]
        %v396 = vld [vmem:[%s1 + $0x160] sm:$0xf]
        %v397 = vld [vmem:[%s1 + $0x164] sm:$0xf]
        %v398 = vld [vmem:[%s1 + $0x168] sm:$0xf]
        %v399 = vld [vmem:[%s1 + $0x16c] sm:$0xf]
        %v400 = vld [vmem:[%s1 + $0x170] sm:$0xf]
        %v401 = vld [vmem:[%s1 + $0x174] sm:$0xf]
        %v402 = vld [vmem:[%s1 + $0x178] sm:$0xf]
        %v403 = vld [vmem:[%s1 + $0x17c] sm:$0xf]
        %v404 = vld [vmem:[%s1 + $0x180] sm:$0xf]
        %v405 = vld [vmem:[%s1 + $0x184] sm:$0xf]
        %v406 = vld [vmem:[%s1 + $0x188] sm:$0xf]
        %v407 = vld [vmem:[%s1 + $0x18c] sm:$0xf]
        %v408 = vld [vmem:[%s1 + $0x190] sm:$0xf]
        %v409 = vld [vmem:[%s1 + $0x194] sm:$0xf]
        %v410 = vld [vmem:[%s1 + $0x198] sm:$0xf]
        %v411 = vld [vmem:[%s1 + $0x19c] sm:$0xf]
        %v412 = vld [vmem:[%s1 + $0x1a0] sm:$0xf]
        %v413 = vld [vmem:[%s1 + $0x1a4] sm:$0xf]
        %v414 = vld [vmem:[%s1 + $0x1a8] sm:$0xf]
        %v415 = vld [vmem:[%s1 + $0x1ac] sm:$0xf]
        %v416 = vld [vmem:[%s1 + $0x1b0] sm:$0xf]
        %v417 = vld [vmem:[%s1 + $0x1b4] sm:$0xf]
        %v418 = vld [vmem:[%s1 + $0x1b8] sm:$0xf]
        %v419 = vld [vmem:[%s1 + $0x1bc] sm:$0xf]
        %v420 = vld [vmem:[%s1 + $0x1c0] sm:$0xf]
        %v421 = vld [vmem:[%s1 + $0x1c4] sm:$0xf]
        %v422 = vld [vmem:[%s1 + $0x1c8] sm:$0xf]
        %v423 = vld [vmem:[%s1 + $0x1cc] sm:$0xf]
        %v424 = vld [vmem:[%s1 + $0x1d0] sm:$0xf]
        %v425 = vld [vmem:[%s1 + $0x1d4] sm:$0xf]
        %v426 = vld [vmem:[%s1 + $0x1d8] sm:$0xf]
        %v427 = vld [vmem:[%s1 + $0x1dc] sm:$0xf]
        %v428 = vld [vmem:[%s1 + $0x1e0] sm:$0xf]
        %v429 = vld [vmem:[%s1 + $0x1e4] sm:$0xf]
        %v430 = vld [vmem:[%s1 + $0x1e8] sm:$0xf]
        %v431 = vld [vmem:[%s1 + $0x1ec] sm:$0xf]
        %v432 = vld [vmem:[%s1 + $0x1f0] sm:$0xf]
        %v433 = vld [vmem:[%s1 + $0x1f4] sm:$0xf]
        %v434 = vld [vmem:[%s1 + $0x1f8] sm:$0xf]
        %v435 = vld [vmem:[%s1 + $0x1fc] sm:$0xf]
        %v436 = vld [vmem:[%s1 + $0x200] sm:$0xf]
        %v437 = vld [vmem:[%s1 + $0x204] sm:$0xf]
        %v438 = vld [vmem:[%s1 + $0x208] sm:$0xf]
        %v439 = vld [vmem:[%s1 + $0x20c] sm:$0xf]
        %v440 = vld [vmem:[%s1 + $0x210] sm:$0xf]
        %v441 = vld [vmem:[%s1 + $0x214] sm:$0xf]
        %v442 = vld [vmem:[%s1 + $0x218] sm:$0xf]
        %v443 = vld [vmem:[%s1 + $0x21c] sm:$0xf]
        %v444 = vld [vmem:[%s1 + $0x220] sm:$0xf]
        %v445 = vld [vmem:[%s1 + $0x224] sm:$0xf]
        %v446 = vld [vmem:[%s1 + $0x228] sm:$0xf]
        %v447 = vld [vmem:[%s1 + $0x22c] sm:$0xf]
        %v448 = vld [vmem:[%s1 + $0x230] sm:$0xf]
        %v449 = vld [vmem:[%s1 + $0x234] sm:$0xf]
        %v450 = vld [vmem:[%s1 + $0x238] sm:$0xf]
        %v451 = vld [vmem:[%s1 + $0x23c] sm:$0xf]
        %v452 = vld [vmem:[%s1 + $0x240] sm:$0xf]
        %v453 = vld [vmem:[%s1 + $0x244] sm:$0xf]
        %v454 = vld [vmem:[%s1 + $0x248] sm:$0xf]
        %v455 = vld [vmem:[%s1 + $0x24c] sm:$0xf]
        %v456 = vld [vmem:[%s1 + $0x250] sm:$0xf]
        %v457 = vld [vmem:[%s1 + $0x254] sm:$0xf]
        %v458 = vld [vmem:[%s1 + $0x258] sm:$0xf]
        %v459 = vld [vmem:[%s1 + $0x25c] sm:$0xf]
        %v460 = vld [vmem:[%s1 + $0x260] sm:$0xf]
        %v461 = vld [vmem:[%s1 + $0x264] sm:$0xf]
        %v462 = vld [vmem:[%s1 + $0x268] sm:$0xf]
        %v463 = vld [vmem:[%s1 + $0x26c] sm:$0xf]
        %v464 = vld [vmem:[%s1 + $0x270] sm:$0xf]
        %v465 = vld [vmem:[%s1 + $0x274] sm:$0xf]
        %v466 = vld [vmem:[%s1 + $0x278] sm:$0xf]
        %v467 = vld [vmem:[%s1 + $0x27c] sm:$0xf]
        %v468 = vld [vmem:[%s1 + $0x280] sm:$0xf]
        %v469 = vld [vmem:[%s1 + $0x284] sm:$0xf]
        %v470 = vld [vmem:[%s1 + $0x288] sm:$0xf]
        %v471 = vld [vmem:[%s1 + $0x28c] sm:$0xf]
        %v472 = vld [vmem:[%s1 + $0x290] sm:$0xf]
        %v473 = vld [vmem:[%s1 + $0x294] sm:$0xf]
        %v474 = vld [vmem:[%s1 + $0x298] sm:$0xf]
        %v475 = vld [vmem:[%s1 + $0x29c] sm:$0xf]
        %v476 = vld [vmem:[%s1 + $0x2a0] sm:$0xf]
        %v477 = vld [vmem:[%s1 + $0x2a4] sm:$0xf]
        %v478 = vld [vmem:[%s1 + $0x2a8] sm:$0xf]
        %v479 = vld [vmem:[%s1 + $0x2ac] sm:$0xf]
        %v480 = vld [vmem:[%s1 + $0x2b0] sm:$0xf]
        %v481 = vld [vmem:[%s1 + $0x2b4] sm:$0xf]
        %v482 = vld [vmem:[%s1 + $0x2b8] sm:$0xf]
        %v483 = vld [vmem:[%s1 + $0x2bc] sm:$0xf]
        %v484 = vld [vmem:[%s1 + $0x2c0] sm:$0xf]
        %v485 = vld [vmem:[%s1 + $0x2c4] sm:$0xf]
        %v486 = vld [vmem:[%s1 + $0x2c8] sm:$0xf]
        %v487 = vld [vmem:[%s1 + $0x2cc] sm:$0xf]
        %v488 = vld [vmem:[%s1 + $0x2d0] sm:$0xf]
        %v489 = vld [vmem:[%s1 + $0x2d4] sm:$0xf]
        %v490 = vld [vmem:[%s1 + $0x2d8] sm:$0xf]
        %v491 = vld [vmem:[%s1 + $0x2dc] sm:$0xf]
        %v492 = vld [vmem:[%s1 + $0x2e0] sm:$0xf]
        %v493 = vld [vmem:[%s1 + $0x2e4] sm:$0xf]
        %v494 = vld [vmem:[%s1 + $0x2e8] sm:$0xf]
        %v495 = vld [vmem:[%s1 + $0x2ec] sm:$0xf]
        %v496 = vld [vmem:[%s1 + $0x2f0] sm:$0xf]
        %v497 = vld [vmem:[%s1 + $0x2f4] sm:$0xf]
        %v498 = vld [vmem:[%s1 + $0x2f8] sm:$0xf]
        %v499 = vld [vmem:[%s1 + $0x2fc] sm:$0xf]
        %v500 = vld [vmem:[%s2] sm:$0x1]
        %v502 = vlaneseq
        %v503 = vshrl.u32 %v502, 7
        %v504 = vsub.s32 0, %v503
        %v505 = vrot.slane %v500, %v504
        %v699 = vunpack.c.l.b16 %v308
        %v700 = vunpack.c.l.b16 %v309
        %v701 = vunpack.c.l.b16 %v310
        %v702 = vunpack.c.l.b16 %v311
        %v703 = vunpack.c.l.b16 %v312
        %v704 = vunpack.c.l.b16 %v313
        %v705 = vunpack.c.l.b16 %v314
        %v706 = vunpack.c.l.b16 %v315
        %v707 = vunpack.c.l.b16 %v316
        %v708 = vunpack.c.l.b16 %v317
        %v709 = vunpack.c.l.b16 %v318
        %v710 = vunpack.c.l.b16 %v319
        %v711 = vunpack.c.l.b16 %v320
        %v712 = vunpack.c.l.b16 %v321
        %v713 = vunpack.c.l.b16 %v322
        %v714 = vunpack.c.l.b16 %v323
        %v715 = vunpack.c.l.b16 %v324
        %v716 = vunpack.c.l.b16 %v325
        %v717 = vunpack.c.l.b16 %v326
        %v718 = vunpack.c.l.b16 %v327
        %v719 = vunpack.c.l.b16 %v328
        %v720 = vunpack.c.l.b16 %v329
        %v721 = vunpack.c.l.b16 %v330
        %v722 = vunpack.c.l.b16 %v331
        %v723 = vunpack.c.l.b16 %v332
        %v724 = vunpack.c.l.b16 %v333
        %v725 = vunpack.c.l.b16 %v334
        %v726 = vunpack.c.l.b16 %v335
        %v727 = vunpack.c.l.b16 %v336
        %v728 = vunpack.c.l.b16 %v337
        %v729 = vunpack.c.l.b16 %v338
        %v730 = vunpack.c.l.b16 %v339
        %v731 = vunpack.c.l.b16 %v340
        %v732 = vunpack.c.l.b16 %v341
        %v733 = vunpack.c.l.b16 %v342
        %v734 = vunpack.c.l.b16 %v343
        %v735 = vunpack.c.l.b16 %v344
        %v736 = vunpack.c.l.b16 %v345
        %v737 = vunpack.c.l.b16 %v346
        %v738 = vunpack.c.l.b16 %v347
        %v739 = vunpack.c.l.b16 %v348
        %v740 = vunpack.c.l.b16 %v349
        %v741 = vunpack.c.l.b16 %v350
        %v742 = vunpack.c.l.b16 %v351
        %v743 = vunpack.c.l.b16 %v352
        %v744 = vunpack.c.l.b16 %v353
        %v745 = vunpack.c.l.b16 %v354
        %v746 = vunpack.c.l.b16 %v355
        %v747 = vunpack.c.l.b16 %v356
        %v748 = vunpack.c.l.b16 %v357
        %v749 = vunpack.c.l.b16 %v358
        %v750 = vunpack.c.l.b16 %v359
        %v751 = vunpack.c.l.b16 %v360
        %v752 = vunpack.c.l.b16 %v361
        %v753 = vunpack.c.l.b16 %v362
        %v754 = vunpack.c.l.b16 %v363
        %v755 = vunpack.c.l.b16 %v364
        %v756 = vunpack.c.l.b16 %v365
        %v757 = vunpack.c.l.b16 %v366
        %v758 = vunpack.c.l.b16 %v367
        %v759 = vunpack.c.l.b16 %v368
        %v760 = vunpack.c.l.b16 %v369
        %v761 = vunpack.c.l.b16 %v370
        %v762 = vunpack.c.l.b16 %v371
        %v763 = vunpack.c.l.b16 %v372
        %v764 = vunpack.c.l.b16 %v373
        %v765 = vunpack.c.l.b16 %v374
        %v766 = vunpack.c.l.b16 %v375
        %v767 = vunpack.c.l.b16 %v376
        %v768 = vunpack.c.l.b16 %v377
        %v769 = vunpack.c.l.b16 %v378
        %v770 = vunpack.c.l.b16 %v379
        %v771 = vunpack.c.l.b16 %v380
        %v772 = vunpack.c.l.b16 %v381
        %v773 = vunpack.c.l.b16 %v382
        %v774 = vunpack.c.l.b16 %v383
        %v775 = vunpack.c.l.b16 %v384
        %v776 = vunpack.c.l.b16 %v385
        %v777 = vunpack.c.l.b16 %v386
        %v778 = vunpack.c.l.b16 %v387
        %v779 = vunpack.c.l.b16 %v388
        %v780 = vunpack.c.l.b16 %v389
        %v781 = vunpack.c.l.b16 %v390
        %v782 = vunpack.c.l.b16 %v391
        %v783 = vunpack.c.l.b16 %v392
        %v784 = vunpack.c.l.b16 %v393
        %v785 = vunpack.c.l.b16 %v394
        %v786 = vunpack.c.l.b16 %v395
        %v787 = vunpack.c.l.b16 %v396
        %v788 = vunpack.c.l.b16 %v397
        %v789 = vunpack.c.l.b16 %v398
        %v790 = vunpack.c.l.b16 %v399
        %v791 = vunpack.c.l.b16 %v400
        %v792 = vunpack.c.l.b16 %v401
        %v793 = vunpack.c.l.b16 %v402
        %v794 = vunpack.c.l.b16 %v403
        %v795 = vunpack.c.l.b16 %v404
        %v796 = vunpack.c.l.b16 %v405
        %v797 = vunpack.c.l.b16 %v406
        %v798 = vunpack.c.l.b16 %v407
        %v799 = vunpack.c.l.b16 %v408
        %v800 = vunpack.c.l.b16 %v409
        %v801 = vunpack.c.l.b16 %v410
        %v802 = vunpack.c.l.b16 %v411
        %v803 = vunpack.c.l.b16 %v412
        %v804 = vunpack.c.l.b16 %v413
        %v805 = vunpack.c.l.b16 %v414
        %v806 = vunpack.c.l.b16 %v415
        %v807 = vunpack.c.l.b16 %v416
        %v808 = vunpack.c.l.b16 %v417
        %v809 = vunpack.c.l.b16 %v418
        %v810 = vunpack.c.l.b16 %v419
        %v811 = vunpack.c.l.b16 %v420
        %v812 = vunpack.c.l.b16 %v421
        %v813 = vunpack.c.l.b16 %v422
        %v814 = vunpack.c.l.b16 %v423
        %v815 = vunpack.c.l.b16 %v424
        %v816 = vunpack.c.l.b16 %v425
        %v817 = vunpack.c.l.b16 %v426
        %v818 = vunpack.c.l.b16 %v427
        %v819 = vunpack.c.l.b16 %v428
        %v820 = vunpack.c.l.b16 %v429
        %v821 = vunpack.c.l.b16 %v430
        %v822 = vunpack.c.l.b16 %v431
        %v823 = vunpack.c.l.b16 %v432
        %v824 = vunpack.c.l.b16 %v433
        %v825 = vunpack.c.l.b16 %v434
        %v826 = vunpack.c.l.b16 %v435
        %v827 = vunpack.c.l.b16 %v436
        %v828 = vunpack.c.l.b16 %v437
        %v829 = vunpack.c.l.b16 %v438
        %v830 = vunpack.c.l.b16 %v439
        %v831 = vunpack.c.l.b16 %v440
        %v832 = vunpack.c.l.b16 %v441
        %v833 = vunpack.c.l.b16 %v442
        %v834 = vunpack.c.l.b16 %v443
        %v835 = vunpack.c.l.b16 %v444
        %v836 = vunpack.c.l.b16 %v445
        %v837 = vunpack.c.l.b16 %v446
        %v838 = vunpack.c.l.b16 %v447
        %v839 = vunpack.c.l.b16 %v448
        %v840 = vunpack.c.l.b16 %v449
        %v841 = vunpack.c.l.b16 %v450
        %v842 = vunpack.c.l.b16 %v451
        %v843 = vunpack.c.l.b16 %v452
        %v844 = vunpack.c.l.b16 %v453
        %v845 = vunpack.c.l.b16 %v454
        %v846 = vunpack.c.l.b16 %v455
        %v847 = vunpack.c.l.b16 %v456
        %v848 = vunpack.c.l.b16 %v457
        %v849 = vunpack.c.l.b16 %v458
        %v850 = vunpack.c.l.b16 %v459
        %v851 = vunpack.c.l.b16 %v460
        %v852 = vunpack.c.l.b16 %v461
        %v853 = vunpack.c.l.b16 %v462
        %v854 = vunpack.c.l.b16 %v463
        %v855 = vunpack.c.l.b16 %v464
        %v856 = vunpack.c.l.b16 %v465
        %v857 = vunpack.c.l.b16 %v466
        %v858 = vunpack.c.l.b16 %v467
        %v859 = vunpack.c.l.b16 %v468
        %v860 = vunpack.c.l.b16 %v469
        %v861 = vunpack.c.l.b16 %v470
        %v862 = vunpack.c.l.b16 %v471
        %v863 = vunpack.c.l.b16 %v472
        %v864 = vunpack.c.l.b16 %v473
        %v865 = vunpack.c.l.b16 %v474
        %v866 = vunpack.c.l.b16 %v475
        %v867 = vunpack.c.l.b16 %v476
        %v868 = vunpack.c.l.b16 %v477
        %v869 = vunpack.c.l.b16 %v478
        %v870 = vunpack.c.l.b16 %v479
        %v871 = vunpack.c.l.b16 %v480
        %v872 = vunpack.c.l.b16 %v481
        %v873 = vunpack.c.l.b16 %v482
        %v874 = vunpack.c.l.b16 %v483
        %v875 = vunpack.c.l.b16 %v484
        %v876 = vunpack.c.l.b16 %v485
        %v877 = vunpack.c.l.b16 %v486
        %v878 = vunpack.c.l.b16 %v487
        %v879 = vunpack.c.l.b16 %v488
        %v880 = vunpack.c.l.b16 %v489
        %v881 = vunpack.c.l.b16 %v490
        %v882 = vunpack.c.l.b16 %v491
        %v883 = vunpack.c.l.b16 %v492
        %v884 = vunpack.c.l.b16 %v493
        %v885 = vunpack.c.l.b16 %v494
        %v886 = vunpack.c.l.b16 %v495
        %v887 = vunpack.c.l.b16 %v496
        %v888 = vunpack.c.l.b16 %v497
        %v889 = vunpack.c.l.b16 %v498
        %v890 = vunpack.c.l.b16 %v499
        %v891 = vpack.c.b16 %v700, %v699
        %v892 = vpack.c.b16 %v702, %v701
        %v893 = vpack.c.b16 %v704, %v703
        %v894 = vpack.c.b16 %v706, %v705
        %v895 = vpack.c.b16 %v708, %v707
        %v896 = vpack.c.b16 %v710, %v709
        %v897 = vpack.c.b16 %v712, %v711
        %v898 = vpack.c.b16 %v714, %v713
        %v899 = vpack.c.b16 %v716, %v715
        %v900 = vpack.c.b16 %v718, %v717
        %v901 = vpack.c.b16 %v720, %v719
        %v902 = vpack.c.b16 %v722, %v721
        %v903 = vpack.c.b16 %v724, %v723
        %v904 = vpack.c.b16 %v726, %v725
        %v905 = vpack.c.b16 %v728, %v727
        %v906 = vpack.c.b16 %v730, %v729
        %v907 = vpack.c.b16 %v732, %v731
        %v908 = vpack.c.b16 %v734, %v733
        %v909 = vpack.c.b16 %v736, %v735
        %v910 = vpack.c.b16 %v738, %v737
        %v911 = vpack.c.b16 %v740, %v739
        %v912 = vpack.c.b16 %v742, %v741
        %v913 = vpack.c.b16 %v744, %v743
        %v914 = vpack.c.b16 %v746, %v745
        %v915 = vpack.c.b16 %v748, %v747
        %v916 = vpack.c.b16 %v750, %v749
        %v917 = vpack.c.b16 %v752, %v751
        %v918 = vpack.c.b16 %v754, %v753
        %v919 = vpack.c.b16 %v756, %v755
        %v920 = vpack.c.b16 %v758, %v757
        %v921 = vpack.c.b16 %v760, %v759
        %v922 = vpack.c.b16 %v762, %v761
        %v923 = vpack.c.b16 %v764, %v763
        %v924 = vpack.c.b16 %v766, %v765
        %v925 = vpack.c.b16 %v768, %v767
        %v926 = vpack.c.b16 %v770, %v769
        %v927 = vpack.c.b16 %v772, %v771
        %v928 = vpack.c.b16 %v774, %v773
        %v929 = vpack.c.b16 %v776, %v775
        %v930 = vpack.c.b16 %v778, %v777
        %v931 = vpack.c.b16 %v780, %v779
        %v932 = vpack.c.b16 %v782, %v781
        %v933 = vpack.c.b16 %v784, %v783
        %v934 = vpack.c.b16 %v786, %v785
        %v935 = vpack.c.b16 %v788, %v787
        %v936 = vpack.c.b16 %v790, %v789
        %v937 = vpack.c.b16 %v792, %v791
        %v938 = vpack.c.b16 %v794, %v793
        %v939 = vpack.c.b16 %v796, %v795
        %v940 = vpack.c.b16 %v798, %v797
        %v941 = vpack.c.b16 %v800, %v799
        %v942 = vpack.c.b16 %v802, %v801
        %v943 = vpack.c.b16 %v804, %v803
        %v944 = vpack.c.b16 %v806, %v805
        %v945 = vpack.c.b16 %v808, %v807
        %v946 = vpack.c.b16 %v810, %v809
        %v947 = vpack.c.b16 %v812, %v811
        %v948 = vpack.c.b16 %v814, %v813
        %v949 = vpack.c.b16 %v816, %v815
        %v950 = vpack.c.b16 %v818, %v817
        %v951 = vpack.c.b16 %v820, %v819
        %v952 = vpack.c.b16 %v822, %v821
        %v953 = vpack.c.b16 %v824, %v823
        %v954 = vpack.c.b16 %v826, %v825
        %v955 = vpack.c.b16 %v828, %v827
        %v956 = vpack.c.b16 %v830, %v829
        %v957 = vpack.c.b16 %v832, %v831
        %v958 = vpack.c.b16 %v834, %v833
        %v959 = vpack.c.b16 %v836, %v835
        %v960 = vpack.c.b16 %v838, %v837
        %v961 = vpack.c.b16 %v840, %v839
        %v962 = vpack.c.b16 %v842, %v841
        %v963 = vpack.c.b16 %v844, %v843
        %v964 = vpack.c.b16 %v846, %v845
        %v965 = vpack.c.b16 %v848, %v847
        %v966 = vpack.c.b16 %v850, %v849
        %v967 = vpack.c.b16 %v852, %v851
        %v968 = vpack.c.b16 %v854, %v853
        %v969 = vpack.c.b16 %v856, %v855
        %v970 = vpack.c.b16 %v858, %v857
        %v971 = vpack.c.b16 %v860, %v859
        %v972 = vpack.c.b16 %v862, %v861
        %v973 = vpack.c.b16 %v864, %v863
        %v974 = vpack.c.b16 %v866, %v865
        %v975 = vpack.c.b16 %v868, %v867
        %v976 = vpack.c.b16 %v870, %v869
        %v977 = vpack.c.b16 %v872, %v871
        %v978 = vpack.c.b16 %v874, %v873
        %v979 = vpack.c.b16 %v876, %v875
        %v980 = vpack.c.b16 %v878, %v877
        %v981 = vpack.c.b16 %v880, %v879
        %v982 = vpack.c.b16 %v882, %v881
        %v983 = vpack.c.b16 %v884, %v883
        %v984 = vpack.c.b16 %v886, %v885
        %v985 = vpack.c.b16 %v888, %v887
        %v986 = vpack.c.b16 %v890, %v889
        %1083 = vmatprep.subr.bf16.mxu0 0
        %1084 = vmatpush1.bf16.msra.mxu0 %v891
        %1085 = vmatprep.subr.bf16.mxu0 0
        %1086 = vmatpush1.bf16.msra.mxu0 %v892
        %1087 = vmatprep.subr.bf16.mxu0 0
        %1088 = vmatpush1.bf16.msra.mxu0 %v893
        %1089 = vmatprep.subr.bf16.mxu0 0
        %1090 = vmatpush1.bf16.msra.mxu0 %v894
        %1091 = vmatprep.subr.bf16.mxu0 0
        %1092 = vmatpush1.bf16.msra.mxu0 %v895
        %1093 = vmatprep.subr.bf16.mxu0 0
        %1094 = vmatpush1.bf16.msra.mxu0 %v896
        %1095 = vmatprep.subr.bf16.mxu0 0
        %1096 = vmatpush1.bf16.msra.mxu0 %v897
        %1097 = vmatprep.subr.bf16.mxu0 0
        %1098 = vmatpush1.bf16.msra.mxu0 %v898
        %1099 = vmatprep.subr.bf16.mxu0 0
        %1100 = vmatpush1.bf16.msra.mxu0 %v899
        %1101 = vmatprep.subr.bf16.mxu0 0
        %1102 = vmatpush1.bf16.msra.mxu0 %v900
        %1103 = vmatprep.subr.bf16.mxu0 0
        %1104 = vmatpush1.bf16.msra.mxu0 %v901
        %1105 = vmatprep.subr.bf16.mxu0 0
        %1106 = vmatpush1.bf16.msra.mxu0 %v902
        %1107 = vmatprep.subr.bf16.mxu0 0
        %1108 = vmatpush1.bf16.msra.mxu0 %v903
        %1109 = vmatprep.subr.bf16.mxu0 0
        %1110 = vmatpush1.bf16.msra.mxu0 %v904
        %1111 = vmatprep.subr.bf16.mxu0 0
        %1112 = vmatpush1.bf16.msra.mxu0 %v905
        %1113 = vmatprep.subr.bf16.mxu0 0
        %1114 = vmatpush1.bf16.msra.mxu0 %v906
        %1115 = vmatprep.mubr.bf16.mxu0 %v297
        %1116 = vmatmul.mubr.bf16.gmra.mrb[0].mxu0 %v296
        %v1117 = vpop.f32.mrb[0].mxu0
        %v1118 = vadd.f32 %v505, %v1117
        %v1119 = vpop.f32.mrb[0].mxu0
        %v1120 = vpop.f32.mrb[0].mxu0
        %v1121 = vadd.f32 %v505, %v1120
        %v1122 = vpop.f32.mrb[0].mxu0
        %1123 = vdwg.mxu0
        %1124 = vmatprep.subr.bf16.mxu0 0
        %1125 = vmatpush1.bf16.msra.mxu0 %v907
        %1126 = vmatprep.subr.bf16.mxu0 0
        %1127 = vmatpush1.bf16.msra.mxu0 %v908
        %1128 = vmatprep.subr.bf16.mxu0 0
        %1129 = vmatpush1.bf16.msra.mxu0 %v909
        %1130 = vmatprep.subr.bf16.mxu0 0
        %1131 = vmatpush1.bf16.msra.mxu0 %v910
        %1132 = vmatprep.subr.bf16.mxu0 0
        %1133 = vmatpush1.bf16.msra.mxu0 %v911
        %1134 = vmatprep.subr.bf16.mxu0 0
        %1135 = vmatpush1.bf16.msra.mxu0 %v912
        %1136 = vmatprep.subr.bf16.mxu0 0
        %1137 = vmatpush1.bf16.msra.mxu0 %v913
        %1138 = vmatprep.subr.bf16.mxu0 0
        %1139 = vmatpush1.bf16.msra.mxu0 %v914
        %1140 = vmatprep.subr.bf16.mxu0 0
        %1141 = vmatpush1.bf16.msra.mxu0 %v915
        %1142 = vmatprep.subr.bf16.mxu0 0
        %1143 = vmatpush1.bf16.msra.mxu0 %v916
        %1144 = vmatprep.subr.bf16.mxu0 0
        %1145 = vmatpush1.bf16.msra.mxu0 %v917
        %1146 = vmatprep.subr.bf16.mxu0 0
        %1147 = vmatpush1.bf16.msra.mxu0 %v918
        %1148 = vmatprep.subr.bf16.mxu0 0
        %1149 = vmatpush1.bf16.msra.mxu0 %v919
        %1150 = vmatprep.subr.bf16.mxu0 0
        %1151 = vmatpush1.bf16.msra.mxu0 %v920
        %1152 = vmatprep.subr.bf16.mxu0 0
        %1153 = vmatpush1.bf16.msra.mxu0 %v921
        %1154 = vmatprep.subr.bf16.mxu0 0
        %1155 = vmatpush1.bf16.msra.mxu0 %v922
        %1156 = vmatprep.mubr.bf16.mxu0 %v299
        %1157 = vmatmul.mubr.bf16.gmra.mrb[0].mxu0 %v298
        %v1158 = vpop.f32.mrb[0].mxu0
        %v1159 = vadd.f32 %v1118, %v1158
        %v1160 = vpop.f32.mrb[0].mxu0
        %v1161 = vpop.f32.mrb[0].mxu0
        %v1162 = vadd.f32 %v1121, %v1161
        %v1163 = vpop.f32.mrb[0].mxu0
        %1164 = vdwg.mxu0
        %1165 = vmatprep.subr.bf16.mxu0 0
        %1166 = vmatpush1.bf16.msra.mxu0 %v923
        %1167 = vmatprep.subr.bf16.mxu0 0
        %1168 = vmatpush1.bf16.msra.mxu0 %v924
        %1169 = vmatprep.subr.bf16.mxu0 0
        %1170 = vmatpush1.bf16.msra.mxu0 %v925
        %1171 = vmatprep.subr.bf16.mxu0 0
        %1172 = vmatpush1.bf16.msra.mxu0 %v926
        %1173 = vmatprep.subr.bf16.mxu0 0
        %1174 = vmatpush1.bf16.msra.mxu0 %v927
        %1175 = vmatprep.subr.bf16.mxu0 0
        %1176 = vmatpush1.bf16.msra.mxu0 %v928
        %1177 = vmatprep.subr.bf16.mxu0 0
        %1178 = vmatpush1.bf16.msra.mxu0 %v929
        %1179 = vmatprep.subr.bf16.mxu0 0
        %1180 = vmatpush1.bf16.msra.mxu0 %v930
        %1181 = vmatprep.subr.bf16.mxu0 0
        %1182 = vmatpush1.bf16.msra.mxu0 %v931
        %1183 = vmatprep.subr.bf16.mxu0 0
        %1184 = vmatpush1.bf16.msra.mxu0 %v932
        %1185 = vmatprep.subr.bf16.mxu0 0
        %1186 = vmatpush1.bf16.msra.mxu0 %v933
        %1187 = vmatprep.subr.bf16.mxu0 0
        %1188 = vmatpush1.bf16.msra.mxu0 %v934
        %1189 = vmatprep.subr.bf16.mxu0 0
        %1190 = vmatpush1.bf16.msra.mxu0 %v935
        %1191 = vmatprep.subr.bf16.mxu0 0
        %1192 = vmatpush1.bf16.msra.mxu0 %v936
        %1193 = vmatprep.subr.bf16.mxu0 0
        %1194 = vmatpush1.bf16.msra.mxu0 %v937
        %1195 = vmatprep.subr.bf16.mxu0 0
        %1196 = vmatpush1.bf16.msra.mxu0 %v938
        %1197 = vmatprep.mubr.bf16.mxu0 %v301
        %1198 = vmatmul.mubr.bf16.gmra.mrb[0].mxu0 %v300
        %v1199 = vpop.f32.mrb[0].mxu0
        %v1200 = vadd.f32 %v1159, %v1199
        %v1201 = vpop.f32.mrb[0].mxu0
        %v1202 = vpop.f32.mrb[0].mxu0
        %v1203 = vadd.f32 %v1162, %v1202
        %v1204 = vpop.f32.mrb[0].mxu0
        %1205 = vdwg.mxu0
        %1206 = vmatprep.subr.bf16.mxu0 0
        %1207 = vmatpush1.bf16.msra.mxu0 %v939
        %1208 = vmatprep.subr.bf16.mxu0 0
        %1209 = vmatpush1.bf16.msra.mxu0 %v940
        %1210 = vmatprep.subr.bf16.mxu0 0
        %1211 = vmatpush1.bf16.msra.mxu0 %v941
        %1212 = vmatprep.subr.bf16.mxu0 0
        %1213 = vmatpush1.bf16.msra.mxu0 %v942
        %1214 = vmatprep.subr.bf16.mxu0 0
        %1215 = vmatpush1.bf16.msra.mxu0 %v943
        %1216 = vmatprep.subr.bf16.mxu0 0
        %1217 = vmatpush1.bf16.msra.mxu0 %v944
        %1218 = vmatprep.subr.bf16.mxu0 0
        %1219 = vmatpush1.bf16.msra.mxu0 %v945
        %1220 = vmatprep.subr.bf16.mxu0 0
        %1221 = vmatpush1.bf16.msra.mxu0 %v946
        %1222 = vmatprep.subr.bf16.mxu0 0
        %1223 = vmatpush1.bf16.msra.mxu0 %v947
        %1224 = vmatprep.subr.bf16.mxu0 0
        %1225 = vmatpush1.bf16.msra.mxu0 %v948
        %1226 = vmatprep.subr.bf16.mxu0 0
        %1227 = vmatpush1.bf16.msra.mxu0 %v949
        %1228 = vmatprep.subr.bf16.mxu0 0
        %1229 = vmatpush1.bf16.msra.mxu0 %v950
        %1230 = vmatprep.subr.bf16.mxu0 0
        %1231 = vmatpush1.bf16.msra.mxu0 %v951
        %1232 = vmatprep.subr.bf16.mxu0 0
        %1233 = vmatpush1.bf16.msra.mxu0 %v952
        %1234 = vmatprep.subr.bf16.mxu0 0
        %1235 = vmatpush1.bf16.msra.mxu0 %v953
        %1236 = vmatprep.subr.bf16.mxu0 0
        %1237 = vmatpush1.bf16.msra.mxu0 %v954
        %1238 = vmatprep.mubr.bf16.mxu0 %v303
        %1239 = vmatmul.mubr.bf16.gmra.mrb[0].mxu0 %v302
        %v1240 = vpop.f32.mrb[0].mxu0
        %v1241 = vadd.f32 %v1200, %v1240
        %v1242 = vpop.f32.mrb[0].mxu0
        %v1243 = vpop.f32.mrb[0].mxu0
        %v1244 = vadd.f32 %v1203, %v1243
        %v1245 = vpop.f32.mrb[0].mxu0
        %1246 = vdwg.mxu0
        %1247 = vmatprep.subr.bf16.mxu0 0
        %1248 = vmatpush1.bf16.msra.mxu0 %v955
        %1249 = vmatprep.subr.bf16.mxu0 0
        %1250 = vmatpush1.bf16.msra.mxu0 %v956
        %1251 = vmatprep.subr.bf16.mxu0 0
        %1252 = vmatpush1.bf16.msra.mxu0 %v957
        %1253 = vmatprep.subr.bf16.mxu0 0
        %1254 = vmatpush1.bf16.msra.mxu0 %v958
        %1255 = vmatprep.subr.bf16.mxu0 0
        %1256 = vmatpush1.bf16.msra.mxu0 %v959
        %1257 = vmatprep.subr.bf16.mxu0 0
        %1258 = vmatpush1.bf16.msra.mxu0 %v960
        %1259 = vmatprep.subr.bf16.mxu0 0
        %1260 = vmatpush1.bf16.msra.mxu0 %v961
        %1261 = vmatprep.subr.bf16.mxu0 0
        %1262 = vmatpush1.bf16.msra.mxu0 %v962
        %1263 = vmatprep.subr.bf16.mxu0 0
        %1264 = vmatpush1.bf16.msra.mxu0 %v963
        %1265 = vmatprep.subr.bf16.mxu0 0
        %1266 = vmatpush1.bf16.msra.mxu0 %v964
        %1267 = vmatprep.subr.bf16.mxu0 0
        %1268 = vmatpush1.bf16.msra.mxu0 %v965
        %1269 = vmatprep.subr.bf16.mxu0 0
        %1270 = vmatpush1.bf16.msra.mxu0 %v966
        %1271 = vmatprep.subr.bf16.mxu0 0
        %1272 = vmatpush1.bf16.msra.mxu0 %v967
        %1273 = vmatprep.subr.bf16.mxu0 0
        %1274 = vmatpush1.bf16.msra.mxu0 %v968
        %1275 = vmatprep.subr.bf16.mxu0 0
        %1276 = vmatpush1.bf16.msra.mxu0 %v969
        %1277 = vmatprep.subr.bf16.mxu0 0
        %1278 = vmatpush1.bf16.msra.mxu0 %v970
        %1279 = vmatprep.mubr.bf16.mxu0 %v305
        %1280 = vmatmul.mubr.bf16.gmra.mrb[0].mxu0 %v304
        %v1281 = vpop.f32.mrb[0].mxu0
        %v1282 = vadd.f32 %v1241, %v1281
        %v1283 = vpop.f32.mrb[0].mxu0
        %v1284 = vpop.f32.mrb[0].mxu0
        %v1285 = vadd.f32 %v1244, %v1284
        %v1286 = vpop.f32.mrb[0].mxu0
        %1287 = vdwg.mxu0
        %1288 = vmatprep.subr.bf16.mxu0 0
        %1289 = vmatpush1.bf16.msra.mxu0 %v971
        %1290 = vmatprep.subr.bf16.mxu0 0
        %1291 = vmatpush1.bf16.msra.mxu0 %v972
        %1292 = vmatprep.subr.bf16.mxu0 0
        %1293 = vmatpush1.bf16.msra.mxu0 %v973
        %1294 = vmatprep.subr.bf16.mxu0 0
        %1295 = vmatpush1.bf16.msra.mxu0 %v974
        %1296 = vmatprep.subr.bf16.mxu0 0
        %1297 = vmatpush1.bf16.msra.mxu0 %v975
        %1298 = vmatprep.subr.bf16.mxu0 0
        %1299 = vmatpush1.bf16.msra.mxu0 %v976
        %1300 = vmatprep.subr.bf16.mxu0 0
        %1301 = vmatpush1.bf16.msra.mxu0 %v977
        %1302 = vmatprep.subr.bf16.mxu0 0
        %1303 = vmatpush1.bf16.msra.mxu0 %v978
        %1304 = vmatprep.subr.bf16.mxu0 0
        %1305 = vmatpush1.bf16.msra.mxu0 %v979
        %1306 = vmatprep.subr.bf16.mxu0 0
        %1307 = vmatpush1.bf16.msra.mxu0 %v980
        %1308 = vmatprep.subr.bf16.mxu0 0
        %1309 = vmatpush1.bf16.msra.mxu0 %v981
        %1310 = vmatprep.subr.bf16.mxu0 0
        %1311 = vmatpush1.bf16.msra.mxu0 %v982
        %1312 = vmatprep.subr.bf16.mxu0 0
        %1313 = vmatpush1.bf16.msra.mxu0 %v983
        %1314 = vmatprep.subr.bf16.mxu0 0
        %1315 = vmatpush1.bf16.msra.mxu0 %v984
        %1316 = vmatprep.subr.bf16.mxu0 0
        %1317 = vmatpush1.bf16.msra.mxu0 %v985
        %1318 = vmatprep.subr.bf16.mxu0 0
        %1319 = vmatpush1.bf16.msra.mxu0 %v986
        %1320 = vmatprep.mubr.bf16.mxu0 %v307
        %1321 = vmatmul.mubr.bf16.gmra.mrb[0].mxu0 %v306
        %v1322 = vpop.f32.mrb[0].mxu0
        %v1323 = vadd.f32 %v1282, %v1322
        %v1324 = vpop.f32.mrb[0].mxu0
        %v1325 = vpop.f32.mrb[0].mxu0
        %v1326 = vadd.f32 %v1285, %v1325
        %v1327 = vpop.f32.mrb[0].mxu0
        %1328 = vdwg.mxu0
        %v1329 = vmax.f32 %v1323, 0.0
        %v1330 = vmax.f32 %v1326, 0.0
        %v1331 = vld [vmem:[%s3] sm:$0x3]
        %v1332 = vld [vmem:[%s4] sm:$0x1]
        %v1334 = vlaneseq
        %v1335 = vshrl.u32 %v1334, 7
        %v1336 = vsub.s32 0, %v1335
        %v1337 = vrot.slane %v1332, %v1336
        %vm1339 = vcmask 15360
        %v1341 = vsel %vm1339, %v1329, 0
        %v1344 = vsel %vm1339, %v1330, 0
        %vm1346 = vcmask 1041408
        %v1348 = vsel %vm1346, %v1331, 0
        %1350 = vmatprep.subr.mxu0 0.0
        %1351 = vmatpush1.msra.mxu0 %v1348
        %1352 = vmatprep.subr.mxu0 0.0
        %1353 = vmatpush1.msra.mxu0 0.0
        %1354 = vmatprep.subr.mxu0 0.0
        %1355 = vmatpush1.msra.mxu0 0.0
        %1356 = vmatprep.subr.mxu0 0.0
        %1357 = vmatpush1.msra.mxu0 0.0
        %1358 = vmatprep.subr.mxu0 0.0
        %1359 = vmatpush1.msra.mxu0 0.0
        %1360 = vmatprep.subr.mxu0 0.0
        %1361 = vmatpush1.msra.mxu0 0.0
        %1362 = vmatprep.subr.mxu0 0.0
        %1363 = vmatpush1.msra.mxu0 0.0
        %1364 = vmatprep.subr.mxu0 0.0
        %1365 = vmatpush1.msra.mxu0 0.0
        %1366 = vmatprep.subr.mxu0 0.0
        %1367 = vmatpush1.msra.mxu0 0.0
        %1368 = vmatprep.subr.mxu0 0.0
        %1369 = vmatpush1.msra.mxu0 0.0
        %1370 = vmatprep.subr.mxu0 0.0
        %1371 = vmatpush1.msra.mxu0 0.0
        %1372 = vmatprep.subr.mxu0 0.0
        %1373 = vmatpush1.msra.mxu0 0.0
        %1374 = vmatprep.subr.mxu0 0.0
        %1375 = vmatpush1.msra.mxu0 0.0
        %1376 = vmatprep.subr.mxu0 0.0
        %1377 = vmatpush1.msra.mxu0 0.0
        %1378 = vmatprep.subr.mxu0 0.0
        %1379 = vmatpush1.msra.mxu0 0.0
        %1380 = vmatprep.subr.mxu0 0.0
        %1381 = vmatpush1.msra.mxu0 0.0
        %1382 = vmatprep.subr.mxu0 0.0
        %1383 = vmatpush1.msra.mxu0 0.0
        %1384 = vmatprep.subr.mxu0 0.0
        %1385 = vmatpush1.msra.mxu0 0.0
        %1386 = vmatprep.subr.mxu0 0.0
        %1387 = vmatpush1.msra.mxu0 0.0
        %1388 = vmatprep.subr.mxu0 0.0
        %1389 = vmatpush1.msra.mxu0 0.0
        %1390 = vmatprep.subr.mxu0 0.0
        %1391 = vmatpush1.msra.mxu0 0.0
        %1392 = vmatprep.subr.mxu0 0.0
        %1393 = vmatpush1.msra.mxu0 0.0
        %1394 = vmatprep.subr.mxu0 0.0
        %1395 = vmatpush1.msra.mxu0 0.0
        %1396 = vmatprep.subr.mxu0 0.0
        %1397 = vmatpush1.msra.mxu0 0.0
        %1398 = vmatprep.subr.mxu0 0.0
        %1399 = vmatpush1.msra.mxu0 0.0
        %1400 = vmatprep.subr.mxu0 0.0
        %1401 = vmatpush1.msra.mxu0 0.0
        %1402 = vmatprep.subr.mxu0 0.0
        %1403 = vmatpush1.msra.mxu0 0.0
        %1404 = vmatprep.subr.mxu0 0.0
        %1405 = vmatpush1.msra.mxu0 0.0
        %1406 = vmatprep.subr.mxu0 0.0
        %1407 = vmatpush1.msra.mxu0 0.0
        %1408 = vmatprep.subr.mxu0 0.0
        %1409 = vmatpush1.msra.mxu0 0.0
        %1410 = vmatprep.subr.mxu0 0.0
        %1411 = vmatpush1.msra.mxu0 0.0
        %1412 = vmatprep.subr.mxu0 0.0
        %1413 = vmatpush1.msra.mxu0 0.0
        %1414 = vmatprep.mubr.f32.mxu0 0.0
        %1415 = vmatmul.mubr.f32.gmra.mrb[0].mxu0 %v1341
        %v1416 = vpop.f32.mrb[0].mxu0
        %v1417 = vadd.f32 %v1337, %v1416
        %v1418 = vpop.f32.mrb[0].mxu0
        %1419 = vmatprep.mubr.f32.mxu0 0.0
        %1420 = vmatmul.mubr.f32.gmra.mrb[0].mxu0 %v1344
        %v1421 = vpop.f32.mrb[0].mxu0
        %v1422 = vadd.f32 %v1337, %v1421
        %v1423 = vpop.f32.mrb[0].mxu0
        %1424 = vdwg.mxu0
        %v1425 = vxor.u32 %v1417, 2147483648
        %v1426 = vxor.u32 %v1422, 2147483648
        %v1427 = vmul.f32 %v1425, 1.442695
        %v1428 = vpow.pop %v1427
        %v1429 = vmul.f32 %v1426, 1.442695
        %v1430 = vpow.pop %v1429
        %v1431 = vadd.f32 %v1428, 1.0
        %v1432 = vadd.f32 %v1430, 1.0
        %v1433 = vrcp.pop %v1431
        %v1434 = vmul.f32 1.0, %v1433
        %v1435 = vrcp.pop %v1432
        %v1436 = vmul.f32 1.0, %v1435
        %v1437 = vpack.c.bf16 %v1436, %v1434
        %v1438 = vld [vmem:[#allocation2] sm:$0xff]
        %v1439 = vld [vmem:[#allocation2 + $0x8] sm:$0xff]
        %v1440 = vld [vmem:[#allocation2 + $0x10] sm:$0xff]
        %v1441 = vld [vmem:[#allocation2 + $0x18] sm:$0xff]
        %v1442 = vld [vmem:[#allocation2 + $0x20] sm:$0xff]
        %v1443 = vld [vmem:[#allocation2 + $0x28] sm:$0xff]
        %v1444 = vld [vmem:[#allocation2 + $0x30] sm:$0xff]
        %v1445 = vld [vmem:[#allocation2 + $0x38] sm:$0xff]
        %v1446 = vld [vmem:[#allocation2 + $0x40] sm:$0xff]
        %v1447 = vld [vmem:[#allocation2 + $0x48] sm:$0xff]
        %v1448 = vld [vmem:[#allocation2 + $0x50] sm:$0xff]
        %v1449 = vld [vmem:[#allocation2 + $0x58] sm:$0xff]
        %v1462 = vunpack.c.l.b16 %v1438
        %v1463 = vunpack.c.h.b16 %v1438
        %v1464 = vunpack.c.l.b16 %v1439
        %v1465 = vunpack.c.h.b16 %v1439
        %v1466 = vunpack.c.l.b16 %v1440
        %v1467 = vunpack.c.h.b16 %v1440
        %v1468 = vunpack.c.l.b16 %v1441
        %v1469 = vunpack.c.h.b16 %v1441
        %v1470 = vunpack.c.l.b16 %v1442
        %v1471 = vunpack.c.h.b16 %v1442
        %v1472 = vunpack.c.l.b16 %v1443
        %v1473 = vunpack.c.h.b16 %v1443
        %v1474 = vunpack.c.l.b16 %v1444
        %v1475 = vunpack.c.h.b16 %v1444
        %v1476 = vunpack.c.l.b16 %v1445
        %v1477 = vunpack.c.h.b16 %v1445
        %v1478 = vunpack.c.l.b16 %v1446
        %v1479 = vunpack.c.h.b16 %v1446
        %v1480 = vunpack.c.l.b16 %v1447
        %v1481 = vunpack.c.h.b16 %v1447
        %v1482 = vunpack.c.l.b16 %v1448
        %v1483 = vunpack.c.h.b16 %v1448
        %v1484 = vunpack.c.l.b16 %v1449
        %v1485 = vunpack.c.h.b16 %v1449
        %v1486 = vpack.c.b16 %v1474, %v1462
        %v1487 = vpack.c.b16 %v1475, %v1463
        %v1488 = vpack.c.b16 %v1476, %v1464
        %v1489 = vpack.c.b16 %v1477, %v1465
        %v1490 = vpack.c.b16 %v1478, %v1466
        %v1491 = vpack.c.b16 %v1479, %v1467
        %v1492 = vpack.c.b16 %v1480, %v1468
        %v1493 = vpack.c.b16 %v1481, %v1469
        %v1494 = vpack.c.b16 %v1482, %v1470
        %v1495 = vpack.c.b16 %v1483, %v1471
        %v1496 = vpack.c.b16 %v1484, %v1472
        %v1497 = vpack.c.b16 %v1485, %v1473
        %vm1510 = vcmask 130048
        %v1512 = vsel %vm1510, %v1437, 0
        %1514 = vmatprep.subr.bf16.mxu0 %v1487
        %1515 = vmatpush1.bf16.msra.mxu0 %v1486
        %1516 = vmatprep.subr.bf16.mxu0 0
        %1517 = vmatpush1.bf16.msra.mxu0 0
        %1518 = vmatprep.subr.bf16.mxu0 0
        %1519 = vmatpush1.bf16.msra.mxu0 0
        %1520 = vmatprep.subr.bf16.mxu0 0
        %1521 = vmatpush1.bf16.msra.mxu0 0
        %1522 = vmatprep.subr.bf16.mxu0 0
        %1523 = vmatpush1.bf16.msra.mxu0 0
        %1524 = vmatprep.subr.bf16.mxu0 0
        %1525 = vmatpush1.bf16.msra.mxu0 0
        %1526 = vmatprep.subr.bf16.mxu0 0
        %1527 = vmatpush1.bf16.msra.mxu0 0
        %1528 = vmatprep.subr.bf16.mxu0 0
        %1529 = vmatpush1.bf16.msra.mxu0 0
        %1530 = vmatprep.subr.bf16.mxu0 0
        %1531 = vmatpush1.bf16.msra.mxu0 0
        %1532 = vmatprep.subr.bf16.mxu0 0
        %1533 = vmatpush1.bf16.msra.mxu0 0
        %1534 = vmatprep.subr.bf16.mxu0 0
        %1535 = vmatpush1.bf16.msra.mxu0 0
        %1536 = vmatprep.subr.bf16.mxu0 0
        %1537 = vmatpush1.bf16.msra.mxu0 0
        %1538 = vmatprep.subr.bf16.mxu0 0
        %1539 = vmatpush1.bf16.msra.mxu0 0
        %1540 = vmatprep.subr.bf16.mxu0 0
        %1541 = vmatpush1.bf16.msra.mxu0 0
        %1542 = vmatprep.subr.bf16.mxu0 0
        %1543 = vmatpush1.bf16.msra.mxu0 0
        %1544 = vmatprep.subr.bf16.mxu0 0
        %1545 = vmatpush1.bf16.msra.mxu0 0
        %1546 = vmatprep.mubr.bf16.mxu0 0
        %1547 = vmatmul.mubr.bf16.gmra.mrb[0].mxu0 %v1512
        %v1548 = vpop.f32.mrb[0].mxu0
        %v1549 = vadd.f32 0.0, %v1548
        %v1550 = vpop.f32.mrb[0].mxu0
        %v1551 = vadd.f32 0.0, %v1550
        %v1552 = vpop.f32.mrb[0].mxu0
        %v1553 = vadd.f32 0.0, %v1552
        %v1554 = vpop.f32.mrb[0].mxu0
        %v1555 = vadd.f32 0.0, %v1554
        %1556 = vdwg.mxu0
        %1557 = vmatprep.subr.bf16.mxu0 %v1489
        %1558 = vmatpush1.bf16.msra.mxu0 %v1488
        %1559 = vmatprep.subr.bf16.mxu0 0
        %1560 = vmatpush1.bf16.msra.mxu0 0
        %1561 = vmatprep.subr.bf16.mxu0 0
        %1562 = vmatpush1.bf16.msra.mxu0 0
        %1563 = vmatprep.subr.bf16.mxu0 0
        %1564 = vmatpush1.bf16.msra.mxu0 0
        %1565 = vmatprep.subr.bf16.mxu0 0
        %1566 = vmatpush1.bf16.msra.mxu0 0
        %1567 = vmatprep.subr.bf16.mxu0 0
        %1568 = vmatpush1.bf16.msra.mxu0 0
        %1569 = vmatprep.subr.bf16.mxu0 0
        %1570 = vmatpush1.bf16.msra.mxu0 0
        %1571 = vmatprep.subr.bf16.mxu0 0
        %1572 = vmatpush1.bf16.msra.mxu0 0
        %1573 = vmatprep.subr.bf16.mxu0 0
        %1574 = vmatpush1.bf16.msra.mxu0 0
        %1575 = vmatprep.subr.bf16.mxu0 0
        %1576 = vmatpush1.bf16.msra.mxu0 0
        %1577 = vmatprep.subr.bf16.mxu0 0
        %1578 = vmatpush1.bf16.msra.mxu0 0
        %1579 = vmatprep.subr.bf16.mxu0 0
        %1580 = vmatpush1.bf16.msra.mxu0 0
        %1581 = vmatprep.subr.bf16.mxu0 0
        %1582 = vmatpush1.bf16.msra.mxu0 0
        %1583 = vmatprep.subr.bf16.mxu0 0
        %1584 = vmatpush1.bf16.msra.mxu0 0
        %1585 = vmatprep.subr.bf16.mxu0 0
        %1586 = vmatpush1.bf16.msra.mxu0 0
        %1587 = vmatprep.subr.bf16.mxu0 0
        %1588 = vmatpush1.bf16.msra.mxu0 0
        %1589 = vmatprep.mubr.bf16.mxu0 0
        %1590 = vmatmul.mubr.bf16.gmra.mrb[0].mxu0 %v1512
        %v1591 = vpop.f32.mrb[0].mxu0
        %v1592 = vadd.f32 0.0, %v1591
        %v1593 = vpop.f32.mrb[0].mxu0
        %v1594 = vadd.f32 0.0, %v1593
        %v1595 = vpop.f32.mrb[0].mxu0
        %v1596 = vadd.f32 0.0, %v1595
        %v1597 = vpop.f32.mrb[0].mxu0
        %v1598 = vadd.f32 0.0, %v1597
        %1599 = vdwg.mxu0
        %1600 = vmatprep.subr.bf16.mxu0 %v1491
        %1601 = vmatpush1.bf16.msra.mxu0 %v1490
        %1602 = vmatprep.subr.bf16.mxu0 0
        %1603 = vmatpush1.bf16.msra.mxu0 0
        %1604 = vmatprep.subr.bf16.mxu0 0
        %1605 = vmatpush1.bf16.msra.mxu0 0
        %1606 = vmatprep.subr.bf16.mxu0 0
        %1607 = vmatpush1.bf16.msra.mxu0 0
        %1608 = vmatprep.subr.bf16.mxu0 0
        %1609 = vmatpush1.bf16.msra.mxu0 0
        %1610 = vmatprep.subr.bf16.mxu0 0
        %1611 = vmatpush1.bf16.msra.mxu0 0
        %1612 = vmatprep.subr.bf16.mxu0 0
        %1613 = vmatpush1.bf16.msra.mxu0 0
        %1614 = vmatprep.subr.bf16.mxu0 0
        %1615 = vmatpush1.bf16.msra.mxu0 0
        %1616 = vmatprep.subr.bf16.mxu0 0
        %1617 = vmatpush1.bf16.msra.mxu0 0
        %1618 = vmatprep.subr.bf16.mxu0 0
        %1619 = vmatpush1.bf16.msra.mxu0 0
        %1620 = vmatprep.subr.bf16.mxu0 0
        %1621 = vmatpush1.bf16.msra.mxu0 0
        %1622 = vmatprep.subr.bf16.mxu0 0
        %1623 = vmatpush1.bf16.msra.mxu0 0
        %1624 = vmatprep.subr.bf16.mxu0 0
        %1625 = vmatpush1.bf16.msra.mxu0 0
        %1626 = vmatprep.subr.bf16.mxu0 0
        %1627 = vmatpush1.bf16.msra.mxu0 0
        %1628 = vmatprep.subr.bf16.mxu0 0
        %1629 = vmatpush1.bf16.msra.mxu0 0
        %1630 = vmatprep.subr.bf16.mxu0 0
        %1631 = vmatpush1.bf16.msra.mxu0 0
        %1632 = vmatprep.mubr.bf16.mxu0 0
        %1633 = vmatmul.mubr.bf16.gmra.mrb[0].mxu0 %v1512
        %v1634 = vpop.f32.mrb[0].mxu0
        %v1635 = vadd.f32 0.0, %v1634
        %v1636 = vpop.f32.mrb[0].mxu0
        %v1637 = vadd.f32 0.0, %v1636
        %v1638 = vpop.f32.mrb[0].mxu0
        %v1639 = vadd.f32 0.0, %v1638
        %v1640 = vpop.f32.mrb[0].mxu0
        %v1641 = vadd.f32 0.0, %v1640
        %1642 = vdwg.mxu0
        %1643 = vmatprep.subr.bf16.mxu0 %v1493
        %1644 = vmatpush1.bf16.msra.mxu0 %v1492
        %1645 = vmatprep.subr.bf16.mxu0 0
        %1646 = vmatpush1.bf16.msra.mxu0 0
        %1647 = vmatprep.subr.bf16.mxu0 0
        %1648 = vmatpush1.bf16.msra.mxu0 0
        %1649 = vmatprep.subr.bf16.mxu0 0
        %1650 = vmatpush1.bf16.msra.mxu0 0
        %1651 = vmatprep.subr.bf16.mxu0 0
        %1652 = vmatpush1.bf16.msra.mxu0 0
        %1653 = vmatprep.subr.bf16.mxu0 0
        %1654 = vmatpush1.bf16.msra.mxu0 0
        %1655 = vmatprep.subr.bf16.mxu0 0
        %1656 = vmatpush1.bf16.msra.mxu0 0
        %1657 = vmatprep.subr.bf16.mxu0 0
        %1658 = vmatpush1.bf16.msra.mxu0 0
        %1659 = vmatprep.subr.bf16.mxu0 0
        %1660 = vmatpush1.bf16.msra.mxu0 0
        %1661 = vmatprep.subr.bf16.mxu0 0
        %1662 = vmatpush1.bf16.msra.mxu0 0
        %1663 = vmatprep.subr.bf16.mxu0 0
        %1664 = vmatpush1.bf16.msra.mxu0 0
        %1665 = vmatprep.subr.bf16.mxu0 0
        %1666 = vmatpush1.bf16.msra.mxu0 0
        %1667 = vmatprep.subr.bf16.mxu0 0
        %1668 = vmatpush1.bf16.msra.mxu0 0
        %1669 = vmatprep.subr.bf16.mxu0 0
        %1670 = vmatpush1.bf16.msra.mxu0 0
        %1671 = vmatprep.subr.bf16.mxu0 0
        %1672 = vmatpush1.bf16.msra.mxu0 0
        %1673 = vmatprep.subr.bf16.mxu0 0
        %1674 = vmatpush1.bf16.msra.mxu0 0
        %1675 = vmatprep.mubr.bf16.mxu0 0
        %1676 = vmatmul.mubr.bf16.gmra.mrb[0].mxu0 %v1512
        %v1677 = vpop.f32.mrb[0].mxu0
        %v1678 = vadd.f32 0.0, %v1677
        %v1679 = vpop.f32.mrb[0].mxu0
        %v1680 = vadd.f32 0.0, %v1679
        %v1681 = vpop.f32.mrb[0].mxu0
        %v1682 = vadd.f32 0.0, %v1681
        %v1683 = vpop.f32.mrb[0].mxu0
        %v1684 = vadd.f32 0.0, %v1683
        %1685 = vdwg.mxu0
        %1686 = vmatprep.subr.bf16.mxu0 %v1495
        %1687 = vmatpush1.bf16.msra.mxu0 %v1494
        %1688 = vmatprep.subr.bf16.mxu0 0
        %1689 = vmatpush1.bf16.msra.mxu0 0
        %1690 = vmatprep.subr.bf16.mxu0 0
        %1691 = vmatpush1.bf16.msra.mxu0 0
        %1692 = vmatprep.subr.bf16.mxu0 0
        %1693 = vmatpush1.bf16.msra.mxu0 0
        %1694 = vmatprep.subr.bf16.mxu0 0
        %1695 = vmatpush1.bf16.msra.mxu0 0
        %1696 = vmatprep.subr.bf16.mxu0 0
        %1697 = vmatpush1.bf16.msra.mxu0 0
        %1698 = vmatprep.subr.bf16.mxu0 0
        %1699 = vmatpush1.bf16.msra.mxu0 0
        %1700 = vmatprep.subr.bf16.mxu0 0
        %1701 = vmatpush1.bf16.msra.mxu0 0
        %1702 = vmatprep.subr.bf16.mxu0 0
        %1703 = vmatpush1.bf16.msra.mxu0 0
        %1704 = vmatprep.subr.bf16.mxu0 0
        %1705 = vmatpush1.bf16.msra.mxu0 0
        %1706 = vmatprep.subr.bf16.mxu0 0
        %1707 = vmatpush1.bf16.msra.mxu0 0
        %1708 = vmatprep.subr.bf16.mxu0 0
        %1709 = vmatpush1.bf16.msra.mxu0 0
        %1710 = vmatprep.subr.bf16.mxu0 0
        %1711 = vmatpush1.bf16.msra.mxu0 0
        %1712 = vmatprep.subr.bf16.mxu0 0
        %1713 = vmatpush1.bf16.msra.mxu0 0
        %1714 = vmatprep.subr.bf16.mxu0 0
        %1715 = vmatpush1.bf16.msra.mxu0 0
        %1716 = vmatprep.subr.bf16.mxu0 0
        %1717 = vmatpush1.bf16.msra.mxu0 0
        %1718 = vmatprep.mubr.bf16.mxu0 0
        %1719 = vmatmul.mubr.bf16.gmra.mrb[0].mxu0 %v1512
        %v1720 = vpop.f32.mrb[0].mxu0
        %v1721 = vadd.f32 0.0, %v1720
        %v1722 = vpop.f32.mrb[0].mxu0
        %v1723 = vadd.f32 0.0, %v1722
        %v1724 = vpop.f32.mrb[0].mxu0
        %v1725 = vadd.f32 0.0, %v1724
        %v1726 = vpop.f32.mrb[0].mxu0
        %v1727 = vadd.f32 0.0, %v1726
        %1728 = vdwg.mxu0
        %1729 = vmatprep.subr.bf16.mxu0 %v1497
        %1730 = vmatpush1.bf16.msra.mxu0 %v1496
        %1731 = vmatprep.subr.bf16.mxu0 0
        %1732 = vmatpush1.bf16.msra.mxu0 0
        %1733 = vmatprep.subr.bf16.mxu0 0
        %1734 = vmatpush1.bf16.msra.mxu0 0
        %1735 = vmatprep.subr.bf16.mxu0 0
        %1736 = vmatpush1.bf16.msra.mxu0 0
        %1737 = vmatprep.subr.bf16.mxu0 0
        %1738 = vmatpush1.bf16.msra.mxu0 0
        %1739 = vmatprep.subr.bf16.mxu0 0
        %1740 = vmatpush1.bf16.msra.mxu0 0
        %1741 = vmatprep.subr.bf16.mxu0 0
        %1742 = vmatpush1.bf16.msra.mxu0 0
        %1743 = vmatprep.subr.bf16.mxu0 0
        %1744 = vmatpush1.bf16.msra.mxu0 0
        %1745 = vmatprep.subr.bf16.mxu0 0
        %1746 = vmatpush1.bf16.msra.mxu0 0
        %1747 = vmatprep.subr.bf16.mxu0 0
        %1748 = vmatpush1.bf16.msra.mxu0 0
        %1749 = vmatprep.subr.bf16.mxu0 0
        %1750 = vmatpush1.bf16.msra.mxu0 0
        %1751 = vmatprep.subr.bf16.mxu0 0
        %1752 = vmatpush1.bf16.msra.mxu0 0
        %1753 = vmatprep.subr.bf16.mxu0 0
        %1754 = vmatpush1.bf16.msra.mxu0 0
        %1755 = vmatprep.subr.bf16.mxu0 0
        %1756 = vmatpush1.bf16.msra.mxu0 0
        %1757 = vmatprep.subr.bf16.mxu0 0
        %1758 = vmatpush1.bf16.msra.mxu0 0
        %1759 = vmatprep.subr.bf16.mxu0 0
        %1760 = vmatpush1.bf16.msra.mxu0 0
        %1761 = vmatprep.mubr.bf16.mxu0 0
        %1762 = vmatmul.mubr.bf16.gmra.mrb[0].mxu0 %v1512
        %v1763 = vpop.f32.mrb[0].mxu0
        %v1764 = vadd.f32 0.0, %v1763
        %v1765 = vpop.f32.mrb[0].mxu0
        %v1766 = vadd.f32 0.0, %v1765
        %v1767 = vpop.f32.mrb[0].mxu0
        %v1768 = vadd.f32 0.0, %v1767
        %v1769 = vpop.f32.mrb[0].mxu0
        %v1770 = vadd.f32 0.0, %v1769
        %1771 = vdwg.mxu0
        %v1772 = vmul.f32 %v272, %v1549
        %v1773 = vmul.f32 %v273, %v1551
        %v1774 = vmul.f32 %v274, %v1592
        %v1775 = vmul.f32 %v275, %v1594
        %v1776 = vmul.f32 %v276, %v1635
        %v1777 = vmul.f32 %v277, %v1637
        %v1778 = vmul.f32 %v278, %v1678
        %v1779 = vmul.f32 %v279, %v1680
        %v1780 = vmul.f32 %v280, %v1721
        %v1781 = vmul.f32 %v281, %v1723
        %v1782 = vmul.f32 %v282, %v1764
        %v1783 = vmul.f32 %v283, %v1766
        %v1784 = vmul.f32 %v284, %v1553
        %v1785 = vmul.f32 %v285, %v1555
        %v1786 = vmul.f32 %v286, %v1596
        %v1787 = vmul.f32 %v287, %v1598
        %v1788 = vmul.f32 %v288, %v1639
        %v1789 = vmul.f32 %v289, %v1641
        %v1790 = vmul.f32 %v290, %v1682
        %v1791 = vmul.f32 %v291, %v1684
        %v1792 = vmul.f32 %v292, %v1725
        %v1793 = vmul.f32 %v293, %v1727
        %v1794 = vmul.f32 %v294, %v1768
        %v1795 = vmul.f32 %v295, %v1770
        %1796 = vst [vmem:[%s262] sm:$0xff] %v1772
        %1797 = vst [vmem:[%s262 + $0x8] sm:$0xff] %v1773
        %1798 = vst [vmem:[%s262 + $0x10] sm:$0xff] %v1774
        %1799 = vst [vmem:[%s262 + $0x18] sm:$0xff] %v1775
        %1800 = vst [vmem:[%s262 + $0x20] sm:$0xff] %v1776
        %1801 = vst [vmem:[%s262 + $0x28] sm:$0xff] %v1777
        %1802 = vst [vmem:[%s262 + $0x30] sm:$0xff] %v1778
        %1803 = vst [vmem:[%s262 + $0x38] sm:$0xff] %v1779
        %1804 = vst [vmem:[%s262 + $0x40] sm:$0xff] %v1780
        %1805 = vst [vmem:[%s262 + $0x48] sm:$0xff] %v1781
        %1806 = vst [vmem:[%s262 + $0x50] sm:$0xff] %v1782
        %1807 = vst [vmem:[%s262 + $0x58] sm:$0xff] %v1783
        %1808 = vst [vmem:[%s262 + $0x60] sm:$0xff] %v1784
        %1809 = vst [vmem:[%s262 + $0x68] sm:$0xff] %v1785
        %1810 = vst [vmem:[%s262 + $0x70] sm:$0xff] %v1786
        %1811 = vst [vmem:[%s262 + $0x78] sm:$0xff] %v1787
        %1812 = vst [vmem:[%s262 + $0x80] sm:$0xff] %v1788
        %1813 = vst [vmem:[%s262 + $0x88] sm:$0xff] %v1789
        %1814 = vst [vmem:[%s262 + $0x90] sm:$0xff] %v1790
        %1815 = vst [vmem:[%s262 + $0x98] sm:$0xff] %v1791
        %1816 = vst [vmem:[%s262 + $0xa0] sm:$0xff] %v1792
        %1817 = vst [vmem:[%s262 + $0xa8] sm:$0xff] %v1793
        %1818 = vst [vmem:[%s262 + $0xb0] sm:$0xff] %v1794
        %1819 = vst [vmem:[%s262 + $0xb8] sm:$0xff] %v1795
        %s1820 = sand.u32 %s160, 1
        %s1821 = scalar_lea.sflag [#allocation4], %s1820
        %s1822 = sand.u32 %s160, 1
        %s1823 = smul.addr %s1822, 192
        %s1824 = scalar_lea.vmem [#allocation5], %s1823
        // Predicated region
        $region49: #{tpu_custom_call.1} parent=43 // pred_check
          %p1825 = pneg %p170
        $region50: #{tpu_custom_call.1} parent=43 // pred_check_branch
          %1827 = sbr.rel (%p1825) target = $region52
        $region51: #{tpu_custom_call.1} parent=43 // pred_region
          %s1828 = smul.u32 2, %s21
          %s1830 = ssub.s32 3072, 3072
          %1831 = vsyncadd %s1821, %s1830
          %s1832 = smul.addr %s1828, 12
          %s1833 = smul.addr %s1832, 128
          %s1834 = scalar_lea.hbm %s6, %s1833
          %s1835 = sshll.u32 %s1824, 4
          %s1836 = int_to_ptr.vmem [resolvable:$true] %s1835
          %1841 = dma.vmem_to_hbm [thread:$0]  %s1836, 3072, %s1834, %s1821, 1536, 1536, 96
        $region52: #{tpu_custom_call.1} parent=43 // pred_fallthru
          _
      $region44: #{tpu_custom_call.1} parent=5 // pred_fallthru
        _
      %p1842 = scmp.le.s32.totalorder 2, %s16
      // Predicated region
      $region53: #{tpu_custom_call.1} parent=5 // pred_check
        %p1843 = pneg %p1842
      $region54: #{tpu_custom_call.1} parent=5 // pred_check_branch
        %1845 = sbr.rel (%p1843) target = $region56
      $region55: #{tpu_custom_call.1} parent=5 // pred_region
        %s1846 = ssub.s32 %s16, 2
        // Predicated region
        $region57: #{tpu_custom_call.1} parent=55 // pred_check
          %p1847 = pneg %p176
        $region58: #{tpu_custom_call.1} parent=55 // pred_check_branch
          %1849 = sbr.rel (%p1847) target = $region60
        $region59: #{tpu_custom_call.1} parent=55 // pred_region
          %s1850 = sand.u32 %s161, 1
          %s1851 = scalar_lea.sflag [#allocation4], %s1850
          %s1852 = sand.u32 %s161, 1
          %s1853 = smul.addr %s1852, 192
          %s1854 = scalar_lea.vmem [#allocation5], %s1853
          %1855 = dma.done %s1851, 3072
        $region60: #{tpu_custom_call.1} parent=55 // pred_fallthru
          _
      $region56: #{tpu_custom_call.1} parent=5 // pred_fallthru
        _
    $region6: #{tpu_custom_call.1} parent=1 // loop_footer
      %s20 = sadd.s32 1, %s16
    $region7: #{tpu_custom_call.1} parent=1 // loop_footer_branch
      %15 = sbr.rel target = $region3
    $region8: #{tpu_custom_call.1} parent=1 // loop_exit
      _
    %1856 = vsyncpa [#allocation3], 1
    %s1857 = scalar_lea.sflag [#allocation3], 1
    %1858 = vsyncpa %s1857, 1
    %1859 = vsyncpa [#allocation4], 1
    %s1860 = scalar_lea.sflag [#allocation4], 1
    %1861 = vsyncpa %s1860, 1

</llo_original>
